<compile_context>
chip_gen: v5e
topology: v5e:2x2
jax: 0.10.0
libtpu: 0.0.40
codegen_flags: <defaults>
</compile_context>

<pallas_src>
import functools

import jax
import jax.numpy as jnp
from jax.experimental import pallas as pl
from jax.experimental.pallas import tpu as pltpu


def _odefunc_kernel(x_ref, w1_ref, b1_ref, w2_ref, b2_ref, o_ref, patch_ref,
                    *, B, H, W, C):
    """Fused Conv3x3(p=1) -> ReLU -> Conv3x3(p=1) on B whole images in (M, C) layout.

    x_ref    : (M, C)     activations, M = B*H*W pixels, row-major (b, h, w)
    w1_ref   : (9*C, C)   im2col-ordered conv1 weights (row order: kh, kw, cin)
    b1_ref   : (1, C)
    w2_ref   : (9*C, C)   im2col-ordered conv2 weights
    b2_ref   : (1, C)
    o_ref    : (M, C)
    patch_ref: (M, 9*C)   f32 im2col scratch (VMEM), fully rewritten per conv
    """
    M = B * H * W
    HW = H * W

    # Edge masks from a pixel-index iota. H, W are powers of two so only bitwise
    # ops are needed (solid VPU lowering, no vector integer div/mod).
    m = jax.lax.broadcasted_iota(jnp.int32, (M, C), 0)
    col = m & (W - 1)                       # column within the image row
    rix = m & (HW - 1)                      # flat pixel index within the image
    not_first_col = col != 0
    not_last_col = col != (W - 1)
    not_first_row = rix >= W
    not_last_row = rix < (HW - W)

    tap_offsets = [(dh, dw) for dh in (-1, 0, 1) for dw in (-1, 0, 1)]

    def build_patch(act):
        """Write the (M, 9*C) im2col matrix for `act` (M, C) into patch_ref.

        Each tap is a sublane roll of the whole block (shift = dh*W + dw) with the
        out-of-image (and cross-image) pixels zeroed by the masks above; taps are
        stored in pairs so every store except the last is 128-lane aligned.
        """
        taps = []
        for dh, dw in tap_offsets:
            s = dh * W + dw
            t = act if s == 0 else pltpu.roll(act, shift=(-s) % M, axis=0)
            mask = None
            if dh == -1:
                mask = not_first_row
            elif dh == 1:
                mask = not_last_row
            if dw == -1:
                mask = not_first_col if mask is None else mask & not_first_col
            elif dw == 1:
                mask = not_last_col if mask is None else mask & not_last_col
            if mask is not None:
                t = jnp.where(mask, t, 0.0)
            taps.append(t)

        # Paired, 128-lane-aligned stores (C == 64): lane offsets 0, 128, 256, 384.
        for p in range(4):
            patch_ref[:, 2 * p * C:(2 * p + 2) * C] = jnp.concatenate(
                [taps[2 * p], taps[2 * p + 1]], axis=1)
        patch_ref[:, 8 * C:9 * C] = taps[8]          # single 64-lane tail store

    def conv3x3(w_ref, b_ref):
        # One large-K (K = 9*C = 576) MXU matmul per conv, f32 accumulation.
        return jnp.dot(patch_ref[...], w_ref[...],
                       preferred_element_type=jnp.float32) + b_ref[...]

    x = x_ref[...].astype(jnp.float32)               # (M, C)

    build_patch(x)
    h = jnp.maximum(conv3x3(w1_ref, b1_ref), 0.0)    # conv1 + ReLU, stays in VMEM

    build_patch(h)
    o_ref[...] = conv3x3(w2_ref, b2_ref).astype(o_ref.dtype)


def prepare_params(params):
    """One-time weight prep (hoisted out of the per-step forward).

    PyTorch OIHW conv weights -> im2col-ordered (9*Cin, Cout); biases -> (1, C).
    Row ordering (kh, kw, cin) matches the patch column ordering in the kernel.
    """
    def to_im2col(w_oihw):
        cout, cin, kh, kw = w_oihw.shape
        w_hwio = jnp.transpose(w_oihw, (2, 3, 1, 0))          # (3, 3, Cin, Cout)
        return w_hwio.reshape(kh * kw * cin, cout).astype(jnp.float32)

    return {
        "w1": to_im2col(params["w1"]),
        "b1": params["b1"].reshape(1, -1).astype(jnp.float32),
        "w2": to_im2col(params["w2"]),
        "b2": params["b2"].reshape(1, -1).astype(jnp.float32),
    }


def _pick_batch_tile(n, hw, target_m=256):
    """Largest divisor of n whose M = bt*hw does not exceed ~target_m MXU rows."""
    per = max(1, target_m // hw)
    best = 1
    for d in range(1, min(per, n) + 1):
        if n % d == 0:
            best = d
    return best


def odefunc_apply_nhwc(y_nhwc, prep):
    """Fused ODEFunc body on NHWC input (preferred layout for solver loops)."""
    N, H, W, C = y_nhwc.shape
    assert C == 64, "ODEFunc is fixed at 64 channels"
    # TODO(synk): non-power-of-two H/W would need div/mod-based (or precomputed) masks.
    assert (H & (H - 1)) == 0 and (W & (W - 1)) == 0, "H, W must be powers of two"
    assert prep["w1"].shape == (9 * C, C) and prep["w2"].shape == (9 * C, C)

    bt = _pick_batch_tile(N, H * W)                   # images folded into matmul M
    m_blk = bt * H * W
    assert m_blk % 8 == 0, "block sublane extent must be a multiple of 8"
    grid_n = N // bt

    x2d = y_nhwc.reshape(N * H * W, C)                # contiguous -> free reshape

    kernel = functools.partial(_odefunc_kernel, B=bt, H=H, W=W, C=C)

    total_pixels = N * H * W
    flops = 4 * total_pixels * (9 * C) * C            # 2 convs x 2*M*K*N
    bytes_accessed = (2 * total_pixels * C + 2 * 9 * C * C + 2 * C) * 4

    out2d = pl.pallas_call(
        kernel,
        out_shape=jax.ShapeDtypeStruct((N * H * W, C), y_nhwc.dtype),
        grid=(grid_n,),
        in_specs=[
            pl.BlockSpec((m_blk, C), lambda n: (n, 0)),
            pl.BlockSpec((9 * C, C), lambda n: (0, 0)),
            pl.BlockSpec((1, C), lambda n: (0, 0)),
            pl.BlockSpec((9 * C, C), lambda n: (0, 0)),
            pl.BlockSpec((1, C), lambda n: (0, 0)),
        ],
        out_specs=pl.BlockSpec((m_blk, C), lambda n: (n, 0)),
        scratch_shapes=[pltpu.VMEM((m_blk, 9 * C), jnp.float32)],   # im2col patches
        compiler_params=pltpu.CompilerParams(
            dimension_semantics=("parallel",)),
        cost_estimate=pl.CostEstimate(flops=flops, transcendentals=0,
                                      bytes_accessed=bytes_accessed),
    )(x2d, prep["w1"], prep["b1"], prep["w2"], prep["b2"])

    return out2d.reshape(N, H, W, C)


def ode_func_forward(t, y_nchw, prep):
    """Equivalent of ODEFunc.forward(t, y) on NCHW input; `t` is unused (as in PyTorch).

    Transposes live only at this compatibility boundary; ODE solvers should keep their
    state in NHWC and call odefunc_apply_nhwc directly to avoid per-stage transposes.
    """
    del t
    y_nhwc = jnp.transpose(y_nchw, (0, 2, 3, 1))
    out = odefunc_apply_nhwc(y_nhwc, prep)
    return jnp.transpose(out, (0, 3, 1, 2))


def _reference_forward(t, y_nchw, params):
    """Pure-JAX reference (lax conv) for correctness checking."""
    del t
    dn = jax.lax.conv_dimension_numbers(y_nchw.shape, params["w1"].shape,
                                        ("NCHW", "OIHW", "NCHW"))
    h = jax.lax.conv_general_dilated(y_nchw, params["w1"], (1, 1), ((1, 1), (1, 1)),
                                     dimension_numbers=dn)
    h = jnp.maximum(h + params["b1"][None, :, None, None], 0.0)
    o = jax.lax.conv_general_dilated(h, params["w2"], (1, 1), ((1, 1), (1, 1)),
                                     dimension_numbers=dn)
    return o + params["b2"][None, :, None, None]


def init_params(key, c=64, k=3):
    """Deterministic synthetic parameters, PyTorch Conv2d weight layout (OIHW)."""
    k1, k2, k3, k4 = jax.random.split(key, 4)
    scale = 1.0 / jnp.sqrt(c * k * k)
    return {
        "w1": jax.random.uniform(k1, (c, c, k, k), jnp.float32, -scale, scale),
        "b1": jax.random.uniform(k2, (c,), jnp.float32, -scale, scale),
        "w2": jax.random.uniform(k3, (c, c, k, k), jnp.float32, -scale, scale),
        "b2": jax.random.uniform(k4, (c,), jnp.float32, -scale, scale),
    }


if __name__ == "__main__":
    key = jax.random.PRNGKey(0)
    pkey, xkey = jax.random.split(key)

    params = init_params(pkey)          # raw PyTorch-layout params
    prep = prepare_params(params)       # hoisted one-time weight prep

    # Small CIFAR-10-ish ODE state: batch=2, channels=64 (fixed by module), spatial=8x8.
    y = jax.random.normal(xkey, (2, 64, 8, 8), jnp.float32)
    t = jnp.float32(0.0)

    fwd = jax.jit(ode_func_forward)
    out = jax.block_until_ready(fwd(t, y, prep))

    ref = jax.block_until_ready(_reference_forward(t, y, params))
    assert out.shape == y.shape, (out.shape, y.shape)
    assert jnp.allclose(out, ref, atol=1e-3, rtol=1e-3), "Pallas fused conv mismatch vs reference"

    print("KERNEL_OK")
</pallas_src>

<mosaic_0001>
module attributes {stable_mosaic.version = 11 : i64} {
  func.func @_odefunc_kernel(%arg0: i32, %arg1: memref<128x64xf32, #tpu.memory_space<vmem>>, %arg2: memref<576x64xf32, #tpu.memory_space<vmem>>, %arg3: memref<1x64xf32, #tpu.memory_space<vmem>>, %arg4: memref<576x64xf32, #tpu.memory_space<vmem>>, %arg5: memref<1x64xf32, #tpu.memory_space<vmem>>, %arg6: memref<128x64xf32, #tpu.memory_space<vmem>>, %arg7: memref<128x576xf32, #tpu.memory_space<vmem>>) attributes {dimension_semantics = [#tpu.dimension_semantics<parallel>], iteration_bounds = array<i64: 1>, scalar_prefetch = 0 : i64, scratch_operands = 1 : i64, tpu.core_type = #tpu.core_type<tc>, window_params = [{transform_indices = @transform_0, window_bounds = array<i64: 128, 64>}, {pipeline_mode = #tpu.pipeline_mode<synchronous>, transform_indices = @transform_1, window_bounds = array<i64: 576, 64>}, {pipeline_mode = #tpu.pipeline_mode<synchronous>, transform_indices = @transform_2, window_bounds = array<i64: 1, 64>}, {pipeline_mode = #tpu.pipeline_mode<synchronous>, transform_indices = @transform_3, window_bounds = array<i64: 576, 64>}, {pipeline_mode = #tpu.pipeline_mode<synchronous>, transform_indices = @transform_4, window_bounds = array<i64: 1, 64>}, {transform_indices = @transform_5, window_bounds = array<i64: 128, 64>}]} {
    %0 = tpu.iota {dimensions = array<i32: 0>} : vector<128x64xi32>
    %c7_i32 = arith.constant 7 : i32
    %1 = vector.broadcast %c7_i32 : i32 to vector<128x64xi32>
    %2 = arith.andi %0, %1 : vector<128x64xi32>
    %c63_i32 = arith.constant 63 : i32
    %3 = vector.broadcast %c63_i32 : i32 to vector<128x64xi32>
    %4 = arith.andi %0, %3 : vector<128x64xi32>
    %c0_i32 = arith.constant 0 : i32
    %5 = vector.broadcast %c0_i32 : i32 to vector<128x64xi32>
    %6 = arith.cmpi ne, %2, %5 : vector<128x64xi32>
    %c7_i32_0 = arith.constant 7 : i32
    %7 = vector.broadcast %c7_i32_0 : i32 to vector<128x64xi32>
    %8 = arith.cmpi ne, %2, %7 : vector<128x64xi32>
    %c8_i32 = arith.constant 8 : i32
    %9 = vector.broadcast %c8_i32 : i32 to vector<128x64xi32>
    %10 = arith.cmpi sge, %4, %9 : vector<128x64xi32>
    %c56_i32 = arith.constant 56 : i32
    %11 = vector.broadcast %c56_i32 : i32 to vector<128x64xi32>
    %12 = arith.cmpi slt, %4, %11 : vector<128x64xi32>
    %c0 = arith.constant 0 : index
    %c0_1 = arith.constant 0 : index
    %13 = vector.load %arg1[%c0, %c0_1] : memref<128x64xf32, #tpu.memory_space<vmem>>, vector<128x64xf32>
    %c9_i32 = arith.constant 9 : i32
    %14 = tpu.dynamic_rotate %13 by %c9_i32 dim 0 : vector<128x64xf32>, i32 -> vector<128x64xf32>
    %15 = arith.andi %10, %6 : vector<128x64xi1>
    %cst = arith.constant 0.000000e+00 : f32
    %16 = vector.broadcast %cst : f32 to vector<128x64xf32>
    %17 = arith.select %15, %14, %16 : vector<128x64xi1>, vector<128x64xf32>
    %c8_i32_2 = arith.constant 8 : i32
    %18 = tpu.dynamic_rotate %13 by %c8_i32_2 dim 0 : vector<128x64xf32>, i32 -> vector<128x64xf32>
    %cst_3 = arith.constant 0.000000e+00 : f32
    %19 = vector.broadcast %cst_3 : f32 to vector<128x64xf32>
    %20 = arith.select %10, %18, %19 : vector<128x64xi1>, vector<128x64xf32>
    %c7_i32_4 = arith.constant 7 : i32
    %21 = tpu.dynamic_rotate %13 by %c7_i32_4 dim 0 : vector<128x64xf32>, i32 -> vector<128x64xf32>
    %22 = arith.andi %10, %8 : vector<128x64xi1>
    %cst_5 = arith.constant 0.000000e+00 : f32
    %23 = vector.broadcast %cst_5 : f32 to vector<128x64xf32>
    %24 = arith.select %22, %21, %23 : vector<128x64xi1>, vector<128x64xf32>
    %c1_i32 = arith.constant 1 : i32
    %25 = tpu.dynamic_rotate %13 by %c1_i32 dim 0 : vector<128x64xf32>, i32 -> vector<128x64xf32>
    %cst_6 = arith.constant 0.000000e+00 : f32
    %26 = vector.broadcast %cst_6 : f32 to vector<128x64xf32>
    %27 = arith.select %6, %25, %26 : vector<128x64xi1>, vector<128x64xf32>
    %c127_i32 = arith.constant 127 : i32
    %28 = tpu.dynamic_rotate %13 by %c127_i32 dim 0 : vector<128x64xf32>, i32 -> vector<128x64xf32>
    %cst_7 = arith.constant 0.000000e+00 : f32
    %29 = vector.broadcast %cst_7 : f32 to vector<128x64xf32>
    %30 = arith.select %8, %28, %29 : vector<128x64xi1>, vector<128x64xf32>
    %c121_i32 = arith.constant 121 : i32
    %31 = tpu.dynamic_rotate %13 by %c121_i32 dim 0 : vector<128x64xf32>, i32 -> vector<128x64xf32>
    %32 = arith.andi %12, %6 : vector<128x64xi1>
    %cst_8 = arith.constant 0.000000e+00 : f32
    %33 = vector.broadcast %cst_8 : f32 to vector<128x64xf32>
    %34 = arith.select %32, %31, %33 : vector<128x64xi1>, vector<128x64xf32>
    %c120_i32 = arith.constant 120 : i32
    %35 = tpu.dynamic_rotate %13 by %c120_i32 dim 0 : vector<128x64xf32>, i32 -> vector<128x64xf32>
    %cst_9 = arith.constant 0.000000e+00 : f32
    %36 = vector.broadcast %cst_9 : f32 to vector<128x64xf32>
    %37 = arith.select %12, %35, %36 : vector<128x64xi1>, vector<128x64xf32>
    %c119_i32 = arith.constant 119 : i32
    %38 = tpu.dynamic_rotate %13 by %c119_i32 dim 0 : vector<128x64xf32>, i32 -> vector<128x64xf32>
    %39 = arith.andi %12, %8 : vector<128x64xi1>
    %cst_10 = arith.constant 0.000000e+00 : f32
    %40 = vector.broadcast %cst_10 : f32 to vector<128x64xf32>
    %41 = arith.select %39, %38, %40 : vector<128x64xi1>, vector<128x64xf32>
    %42 = tpu.concatenate %17, %20 in 1 : vector<128x64xf32>, vector<128x64xf32> -> vector<128x128xf32>
    %c0_11 = arith.constant 0 : index
    %c0_12 = arith.constant 0 : index
    %43 = vector.load %arg7[%c0_11, %c0_12] : memref<128x576xf32, #tpu.memory_space<vmem>>, vector<128x128xf32>
    tpu.vector_store %arg7[%c0_11, %c0_12], %42 {strides = array<i32>} : memref<128x576xf32, #tpu.memory_space<vmem>>, vector<128x128xf32>,
    %44 = tpu.concatenate %24, %27 in 1 : vector<128x64xf32>, vector<128x64xf32> -> vector<128x128xf32>
    %c0_13 = arith.constant 0 : index
    %c128 = arith.constant 128 : index
    %45 = vector.load %arg7[%c0_13, %c128] : memref<128x576xf32, #tpu.memory_space<vmem>>, vector<128x128xf32>
    tpu.vector_store %arg7[%c0_13, %c128], %44 {strides = array<i32>} : memref<128x576xf32, #tpu.memory_space<vmem>>, vector<128x128xf32>,
    %46 = tpu.concatenate %13, %30 in 1 : vector<128x64xf32>, vector<128x64xf32> -> vector<128x128xf32>
    %c0_14 = arith.constant 0 : index
    %c256 = arith.constant 256 : index
    %47 = vector.load %arg7[%c0_14, %c256] : memref<128x576xf32, #tpu.memory_space<vmem>>, vector<128x128xf32>
    tpu.vector_store %arg7[%c0_14, %c256], %46 {strides = array<i32>} : memref<128x576xf32, #tpu.memory_space<vmem>>, vector<128x128xf32>,
    %48 = tpu.concatenate %34, %37 in 1 : vector<128x64xf32>, vector<128x64xf32> -> vector<128x128xf32>
    %c0_15 = arith.constant 0 : index
    %c384 = arith.constant 384 : index
    %49 = vector.load %arg7[%c0_15, %c384] : memref<128x576xf32, #tpu.memory_space<vmem>>, vector<128x128xf32>
    tpu.vector_store %arg7[%c0_15, %c384], %48 {strides = array<i32>} : memref<128x576xf32, #tpu.memory_space<vmem>>, vector<128x128xf32>,
    %c0_16 = arith.constant 0 : index
    %c512 = arith.constant 512 : index
    %50 = vector.load %arg7[%c0_16, %c512] : memref<128x576xf32, #tpu.memory_space<vmem>>, vector<128x64xf32>
    tpu.vector_store %arg7[%c0_16, %c512], %41 {strides = array<i32>} : memref<128x576xf32, #tpu.memory_space<vmem>>, vector<128x64xf32>,
    %c0_17 = arith.constant 0 : index
    %c0_18 = arith.constant 0 : index
    %51 = vector.load %arg7[%c0_17, %c0_18] : memref<128x576xf32, #tpu.memory_space<vmem>>, vector<128x576xf32>
    %c0_19 = arith.constant 0 : index
    %c0_20 = arith.constant 0 : index
    %52 = vector.load %arg2[%c0_19, %c0_20] : memref<576x64xf32, #tpu.memory_space<vmem>>, vector<576x64xf32>
    %cst_21 = arith.constant dense<0.000000e+00> : vector<128x64xf32>
    %53 = tpu.matmul %51, %52, %cst_21 {dimension_numbers = #tpu.dot_dimension_numbers<[1], [0], [0], [1], [0, 0, 1, 1], [], []>} : vector<128x576xf32>, vector<576x64xf32>, vector<128x64xf32> -> vector<128x64xf32>
    %c0_22 = arith.constant 0 : index
    %c0_23 = arith.constant 0 : index
    %54 = vector.load %arg3[%c0_22, %c0_23] : memref<1x64xf32, #tpu.memory_space<vmem>>, vector<1x64xf32>
    %55 = vector.broadcast %54 : vector<1x64xf32> to vector<128x64xf32>
    %56 = arith.addf %53, %55 : vector<128x64xf32>
    %cst_24 = arith.constant 0.000000e+00 : f32
    %57 = vector.broadcast %cst_24 : f32 to vector<128x64xf32>
    %58 = arith.maximumf %56, %57 : vector<128x64xf32>
    %c9_i32_25 = arith.constant 9 : i32
    %59 = tpu.dynamic_rotate %58 by %c9_i32_25 dim 0 : vector<128x64xf32>, i32 -> vector<128x64xf32>
    %60 = arith.andi %10, %6 : vector<128x64xi1>
    %cst_26 = arith.constant 0.000000e+00 : f32
    %61 = vector.broadcast %cst_26 : f32 to vector<128x64xf32>
    %62 = arith.select %60, %59, %61 : vector<128x64xi1>, vector<128x64xf32>
    %c8_i32_27 = arith.constant 8 : i32
    %63 = tpu.dynamic_rotate %58 by %c8_i32_27 dim 0 : vector<128x64xf32>, i32 -> vector<128x64xf32>
    %cst_28 = arith.constant 0.000000e+00 : f32
    %64 = vector.broadcast %cst_28 : f32 to vector<128x64xf32>
    %65 = arith.select %10, %63, %64 : vector<128x64xi1>, vector<128x64xf32>
    %c7_i32_29 = arith.constant 7 : i32
    %66 = tpu.dynamic_rotate %58 by %c7_i32_29 dim 0 : vector<128x64xf32>, i32 -> vector<128x64xf32>
    %67 = arith.andi %10, %8 : vector<128x64xi1>
    %cst_30 = arith.constant 0.000000e+00 : f32
    %68 = vector.broadcast %cst_30 : f32 to vector<128x64xf32>
    %69 = arith.select %67, %66, %68 : vector<128x64xi1>, vector<128x64xf32>
    %c1_i32_31 = arith.constant 1 : i32
    %70 = tpu.dynamic_rotate %58 by %c1_i32_31 dim 0 : vector<128x64xf32>, i32 -> vector<128x64xf32>
    %cst_32 = arith.constant 0.000000e+00 : f32
    %71 = vector.broadcast %cst_32 : f32 to vector<128x64xf32>
    %72 = arith.select %6, %70, %71 : vector<128x64xi1>, vector<128x64xf32>
    %c127_i32_33 = arith.constant 127 : i32
    %73 = tpu.dynamic_rotate %58 by %c127_i32_33 dim 0 : vector<128x64xf32>, i32 -> vector<128x64xf32>
    %cst_34 = arith.constant 0.000000e+00 : f32
    %74 = vector.broadcast %cst_34 : f32 to vector<128x64xf32>
    %75 = arith.select %8, %73, %74 : vector<128x64xi1>, vector<128x64xf32>
    %c121_i32_35 = arith.constant 121 : i32
    %76 = tpu.dynamic_rotate %58 by %c121_i32_35 dim 0 : vector<128x64xf32>, i32 -> vector<128x64xf32>
    %77 = arith.andi %12, %6 : vector<128x64xi1>
    %cst_36 = arith.constant 0.000000e+00 : f32
    %78 = vector.broadcast %cst_36 : f32 to vector<128x64xf32>
    %79 = arith.select %77, %76, %78 : vector<128x64xi1>, vector<128x64xf32>
    %c120_i32_37 = arith.constant 120 : i32
    %80 = tpu.dynamic_rotate %58 by %c120_i32_37 dim 0 : vector<128x64xf32>, i32 -> vector<128x64xf32>
    %cst_38 = arith.constant 0.000000e+00 : f32
    %81 = vector.broadcast %cst_38 : f32 to vector<128x64xf32>
    %82 = arith.select %12, %80, %81 : vector<128x64xi1>, vector<128x64xf32>
    %c119_i32_39 = arith.constant 119 : i32
    %83 = tpu.dynamic_rotate %58 by %c119_i32_39 dim 0 : vector<128x64xf32>, i32 -> vector<128x64xf32>
    %84 = arith.andi %12, %8 : vector<128x64xi1>
    %cst_40 = arith.constant 0.000000e+00 : f32
    %85 = vector.broadcast %cst_40 : f32 to vector<128x64xf32>
    %86 = arith.select %84, %83, %85 : vector<128x64xi1>, vector<128x64xf32>
    %87 = tpu.concatenate %62, %65 in 1 : vector<128x64xf32>, vector<128x64xf32> -> vector<128x128xf32>
    %c0_41 = arith.constant 0 : index
    %c0_42 = arith.constant 0 : index
    %88 = vector.load %arg7[%c0_41, %c0_42] : memref<128x576xf32, #tpu.memory_space<vmem>>, vector<128x128xf32>
    tpu.vector_store %arg7[%c0_41, %c0_42], %87 {strides = array<i32>} : memref<128x576xf32, #tpu.memory_space<vmem>>, vector<128x128xf32>,
    %89 = tpu.concatenate %69, %72 in 1 : vector<128x64xf32>, vector<128x64xf32> -> vector<128x128xf32>
    %c0_43 = arith.constant 0 : index
    %c128_44 = arith.constant 128 : index
    %90 = vector.load %arg7[%c0_43, %c128_44] : memref<128x576xf32, #tpu.memory_space<vmem>>, vector<128x128xf32>
    tpu.vector_store %arg7[%c0_43, %c128_44], %89 {strides = array<i32>} : memref<128x576xf32, #tpu.memory_space<vmem>>, vector<128x128xf32>,
    %91 = tpu.concatenate %58, %75 in 1 : vector<128x64xf32>, vector<128x64xf32> -> vector<128x128xf32>
    %c0_45 = arith.constant 0 : index
    %c256_46 = arith.constant 256 : index
    %92 = vector.load %arg7[%c0_45, %c256_46] : memref<128x576xf32, #tpu.memory_space<vmem>>, vector<128x128xf32>
    tpu.vector_store %arg7[%c0_45, %c256_46], %91 {strides = array<i32>} : memref<128x576xf32, #tpu.memory_space<vmem>>, vector<128x128xf32>,
    %93 = tpu.concatenate %79, %82 in 1 : vector<128x64xf32>, vector<128x64xf32> -> vector<128x128xf32>
    %c0_47 = arith.constant 0 : index
    %c384_48 = arith.constant 384 : index
    %94 = vector.load %arg7[%c0_47, %c384_48] : memref<128x576xf32, #tpu.memory_space<vmem>>, vector<128x128xf32>
    tpu.vector_store %arg7[%c0_47, %c384_48], %93 {strides = array<i32>} : memref<128x576xf32, #tpu.memory_space<vmem>>, vector<128x128xf32>,
    %c0_49 = arith.constant 0 : index
    %c512_50 = arith.constant 512 : index
    %95 = vector.load %arg7[%c0_49, %c512_50] : memref<128x576xf32, #tpu.memory_space<vmem>>, vector<128x64xf32>
    tpu.vector_store %arg7[%c0_49, %c512_50], %86 {strides = array<i32>} : memref<128x576xf32, #tpu.memory_space<vmem>>, vector<128x64xf32>,
    %c0_51 = arith.constant 0 : index
    %c0_52 = arith.constant 0 : index
    %96 = vector.load %arg7[%c0_51, %c0_52] : memref<128x576xf32, #tpu.memory_space<vmem>>, vector<128x576xf32>
    %c0_53 = arith.constant 0 : index
    %c0_54 = arith.constant 0 : index
    %97 = vector.load %arg4[%c0_53, %c0_54] : memref<576x64xf32, #tpu.memory_space<vmem>>, vector<576x64xf32>
    %cst_55 = arith.constant dense<0.000000e+00> : vector<128x64xf32>
    %98 = tpu.matmul %96, %97, %cst_55 {dimension_numbers = #tpu.dot_dimension_numbers<[1], [0], [0], [1], [0, 0, 1, 1], [], []>} : vector<128x576xf32>, vector<576x64xf32>, vector<128x64xf32> -> vector<128x64xf32>
    %c0_56 = arith.constant 0 : index
    %c0_57 = arith.constant 0 : index
    %99 = vector.load %arg5[%c0_56, %c0_57] : memref<1x64xf32, #tpu.memory_space<vmem>>, vector<1x64xf32>
    %100 = vector.broadcast %99 : vector<1x64xf32> to vector<128x64xf32>
    %101 = arith.addf %98, %100 : vector<128x64xf32>
    %c0_58 = arith.constant 0 : index
    %c0_59 = arith.constant 0 : index
    %102 = vector.load %arg6[%c0_58, %c0_59] : memref<128x64xf32, #tpu.memory_space<vmem>>, vector<128x64xf32>
    tpu.vector_store %arg6[%c0_58, %c0_59], %101 {strides = array<i32>} : memref<128x64xf32, #tpu.memory_space<vmem>>, vector<128x64xf32>,
    return
  }
  func.func @transform_0(%arg0: i32) -> (i32, i32) {
    %c0_i32 = arith.constant 0 : i32
    %c0_i32_0 = arith.constant 0 : i32
    return %arg0, %c0_i32 : i32, i32
  }
  func.func @transform_1(%arg0: i32) -> (i32, i32) {
    %c0_i32 = arith.constant 0 : i32
    %c0_i32_0 = arith.constant 0 : i32
    %c0_i32_1 = arith.constant 0 : i32
    return %c0_i32, %c0_i32_0 : i32, i32
  }
  func.func @transform_2(%arg0: i32) -> (i32, i32) {
    %c0_i32 = arith.constant 0 : i32
    %c0_i32_0 = arith.constant 0 : i32
    %c0_i32_1 = arith.constant 0 : i32
    return %c0_i32, %c0_i32_0 : i32, i32
  }
  func.func @transform_3(%arg0: i32) -> (i32, i32) {
    %c0_i32 = arith.constant 0 : i32
    %c0_i32_0 = arith.constant 0 : i32
    %c0_i32_1 = arith.constant 0 : i32
    return %c0_i32, %c0_i32_0 : i32, i32
  }
  func.func @transform_4(%arg0: i32) -> (i32, i32) {
    %c0_i32 = arith.constant 0 : i32
    %c0_i32_0 = arith.constant 0 : i32
    %c0_i32_1 = arith.constant 0 : i32
    return %c0_i32, %c0_i32_0 : i32, i32
  }
  func.func @transform_5(%arg0: i32) -> (i32, i32) {
    %c0_i32 = arith.constant 0 : i32
    %c0_i32_0 = arith.constant 0 : i32
    return %arg0, %c0_i32 : i32, i32
  }
}

</mosaic_0001>

<llo_original>
// kernel: ode_func_forward.1
$region0: #{ode_func_forward.1}
  #allocation0 [shape = 'u32[]', space=smem, size = 0x4, offset = 0x4, fixed_abs, tag = 'smem constant byte address 0x4 - core index']
  #allocation1 [shape = 'u32[72,128]{1,0:T(1,128)}', space=vmem, size = 0x9000, scoped, tag = 'internal scratch']
  #allocation2 [shape = 'f32[128,576]{1,0:T(8,128)}', space=vmem, size = 0x50000, scoped, tag = 'scratch operand']
  %s0 = inlined_call_operand.vmem [shape: f32[128,64], index: 0, kind: input, shape index: {}]
  %s1 = inlined_call_operand.vmem [shape: f32[576,64], index: 1, kind: input, shape index: {}]
  %s2 = inlined_call_operand.vmem [shape: f32[1,64], index: 2, kind: input, shape index: {}]
  %s3 = inlined_call_operand.vmem [shape: f32[576,64], index: 3, kind: input, shape index: {}]
  %s4 = inlined_call_operand.vmem [shape: f32[1,64], index: 4, kind: input, shape index: {}]
  %s5 = inlined_call_operand.hbm [shape: f32[128,64], index: 5, kind: output, shape index: {}]
  %s6 = sld [smem:[#allocation0]]
  $region30: #{ode_func_forward.1} parent=0
    _
  %s8 = ssub.s32 1, %s6
  %s9 = scalar_select 0, %s8, %s6
  $region1: #{ode_func_forward.1} parent=0
    #allocation3 [shape = 'u8[65536]{0}', space=vmem, size = 0x10000, scoped, tag = 'output window, operand 0, single buffered']
    #allocation4 [shape = 's32[1]{0}', space=sflag, size = 0x4, scoped, tag = 'scoped memory for ode_func_forward.1']
    %10 = vsyncpa [#allocation4], 0
    // Predicated region
    $region2: #{ode_func_forward.1} parent=1 // pred_check
      _
    $region3: #{ode_func_forward.1} parent=1 // pred_check_branch
      %12 = sbr.rel (0) target = $region5
    $region4: #{ode_func_forward.1} parent=1 // pred_region
      _
    $region5: #{ode_func_forward.1} parent=1 // pred_fallthru
      _
    // Predicated region
    $region6: #{ode_func_forward.1} parent=1 // pred_check
      _
    $region7: #{ode_func_forward.1} parent=1 // pred_check_branch
      %14 = sbr.rel (0) target = $region9
    $region8: #{ode_func_forward.1} parent=1 // pred_region
      _
    $region9: #{ode_func_forward.1} parent=1 // pred_fallthru
      _
    // Predicated region
    $region10: #{ode_func_forward.1} parent=1 // pred_check
      _
    $region11: #{ode_func_forward.1} parent=1 // pred_check_branch
      %16 = sbr.rel (0) target = $region13
    $region12: #{ode_func_forward.1} parent=1 // pred_region
      _
    $region13: #{ode_func_forward.1} parent=1 // pred_fallthru
      _
    // Predicated region
    $region14: #{ode_func_forward.1} parent=1 // pred_check
      _
    $region15: #{ode_func_forward.1} parent=1 // pred_check_branch
      %18 = sbr.rel (0) target = $region17
    $region16: #{ode_func_forward.1} parent=1 // pred_region
      _
    $region17: #{ode_func_forward.1} parent=1 // pred_fallthru
      _
    // Predicated region
    $region18: #{ode_func_forward.1} parent=1 // pred_check
      _
    $region19: #{ode_func_forward.1} parent=1 // pred_check_branch
      %20 = sbr.rel (0) target = $region21
    $region20: #{ode_func_forward.1} parent=1 // pred_region
      _
    $region21: #{ode_func_forward.1} parent=1 // pred_fallthru
      _
    %v21 = vlaneseq
    %v22 = vshrl.u32 %v21, 7
    %v23 = vadd.s32 %v22, 8
    %v24 = vadd.s32 %v22, 16
    %v25 = vadd.s32 %v22, 24
    %v26 = vadd.s32 %v22, 32
    %v27 = vadd.s32 %v22, 40
    %v28 = vadd.s32 %v22, 48
    %v29 = vadd.s32 %v22, 56
    %v30 = vadd.s32 %v22, 64
    %v31 = vadd.s32 %v22, 72
    %v32 = vadd.s32 %v22, 80
    %v33 = vadd.s32 %v22, 88
    %v34 = vadd.s32 %v22, 96
    %v35 = vadd.s32 %v22, 104
    %v36 = vadd.s32 %v22, 112
    %v37 = vadd.s32 %v22, 120
    %v38 = vand.u32 %v22, 7
    %v39 = vand.u32 %v23, 7
    %v40 = vand.u32 %v24, 7
    %v41 = vand.u32 %v25, 7
    %v42 = vand.u32 %v26, 7
    %v43 = vand.u32 %v27, 7
    %v44 = vand.u32 %v28, 7
    %v45 = vand.u32 %v29, 7
    %v46 = vand.u32 %v30, 7
    %v47 = vand.u32 %v31, 7
    %v48 = vand.u32 %v32, 7
    %v49 = vand.u32 %v33, 7
    %v50 = vand.u32 %v34, 7
    %v51 = vand.u32 %v35, 7
    %v52 = vand.u32 %v36, 7
    %v53 = vand.u32 %v37, 7
    %v54 = vand.u32 %v22, 63
    %v55 = vand.u32 %v23, 63
    %v56 = vand.u32 %v24, 63
    %v57 = vand.u32 %v25, 63
    %v58 = vand.u32 %v26, 63
    %v59 = vand.u32 %v27, 63
    %v60 = vand.u32 %v28, 63
    %v61 = vand.u32 %v29, 63
    %v62 = vand.u32 %v30, 63
    %v63 = vand.u32 %v31, 63
    %v64 = vand.u32 %v32, 63
    %v65 = vand.u32 %v33, 63
    %v66 = vand.u32 %v34, 63
    %v67 = vand.u32 %v35, 63
    %v68 = vand.u32 %v36, 63
    %v69 = vand.u32 %v37, 63
    %vm70 = vcmp.ne.s32.totalorder %v38, 0
    %vm71 = vcmp.ne.s32.totalorder %v39, 0
    %vm72 = vcmp.ne.s32.totalorder %v40, 0
    %vm73 = vcmp.ne.s32.totalorder %v41, 0
    %vm74 = vcmp.ne.s32.totalorder %v42, 0
    %vm75 = vcmp.ne.s32.totalorder %v43, 0
    %vm76 = vcmp.ne.s32.totalorder %v44, 0
    %vm77 = vcmp.ne.s32.totalorder %v45, 0
    %vm78 = vcmp.ne.s32.totalorder %v46, 0
    %vm79 = vcmp.ne.s32.totalorder %v47, 0
    %vm80 = vcmp.ne.s32.totalorder %v48, 0
    %vm81 = vcmp.ne.s32.totalorder %v49, 0
    %vm82 = vcmp.ne.s32.totalorder %v50, 0
    %vm83 = vcmp.ne.s32.totalorder %v51, 0
    %vm84 = vcmp.ne.s32.totalorder %v52, 0
    %vm85 = vcmp.ne.s32.totalorder %v53, 0
    %vm86 = vcmp.ne.s32.totalorder %v38, 7
    %vm87 = vcmp.ne.s32.totalorder %v39, 7
    %vm88 = vcmp.ne.s32.totalorder %v40, 7
    %vm89 = vcmp.ne.s32.totalorder %v41, 7
    %vm90 = vcmp.ne.s32.totalorder %v42, 7
    %vm91 = vcmp.ne.s32.totalorder %v43, 7
    %vm92 = vcmp.ne.s32.totalorder %v44, 7
    %vm93 = vcmp.ne.s32.totalorder %v45, 7
    %vm94 = vcmp.ne.s32.totalorder %v46, 7
    %vm95 = vcmp.ne.s32.totalorder %v47, 7
    %vm96 = vcmp.ne.s32.totalorder %v48, 7
    %vm97 = vcmp.ne.s32.totalorder %v49, 7
    %vm98 = vcmp.ne.s32.totalorder %v50, 7
    %vm99 = vcmp.ne.s32.totalorder %v51, 7
    %vm100 = vcmp.ne.s32.totalorder %v52, 7
    %vm101 = vcmp.ne.s32.totalorder %v53, 7
    %vm102 = vcmp.ge.s32.totalorder %v54, 8
    %vm103 = vcmp.ge.s32.totalorder %v55, 8
    %vm104 = vcmp.ge.s32.totalorder %v56, 8
    %vm105 = vcmp.ge.s32.totalorder %v57, 8
    %vm106 = vcmp.ge.s32.totalorder %v58, 8
    %vm107 = vcmp.ge.s32.totalorder %v59, 8
    %vm108 = vcmp.ge.s32.totalorder %v60, 8
    %vm109 = vcmp.ge.s32.totalorder %v61, 8
    %vm110 = vcmp.ge.s32.totalorder %v62, 8
    %vm111 = vcmp.ge.s32.totalorder %v63, 8
    %vm112 = vcmp.ge.s32.totalorder %v64, 8
    %vm113 = vcmp.ge.s32.totalorder %v65, 8
    %vm114 = vcmp.ge.s32.totalorder %v66, 8
    %vm115 = vcmp.ge.s32.totalorder %v67, 8
    %vm116 = vcmp.ge.s32.totalorder %v68, 8
    %vm117 = vcmp.ge.s32.totalorder %v69, 8
    %vm118 = vcmp.lt.s32.totalorder %v54, 56
    %vm119 = vcmp.lt.s32.totalorder %v55, 56
    %vm120 = vcmp.lt.s32.totalorder %v56, 56
    %vm121 = vcmp.lt.s32.totalorder %v57, 56
    %vm122 = vcmp.lt.s32.totalorder %v58, 56
    %vm123 = vcmp.lt.s32.totalorder %v59, 56
    %vm124 = vcmp.lt.s32.totalorder %v60, 56
    %vm125 = vcmp.lt.s32.totalorder %v61, 56
    %vm126 = vcmp.lt.s32.totalorder %v62, 56
    %vm127 = vcmp.lt.s32.totalorder %v63, 56
    %vm128 = vcmp.lt.s32.totalorder %v64, 56
    %vm129 = vcmp.lt.s32.totalorder %v65, 56
    %vm130 = vcmp.lt.s32.totalorder %v66, 56
    %vm131 = vcmp.lt.s32.totalorder %v67, 56
    %vm132 = vcmp.lt.s32.totalorder %v68, 56
    %vm133 = vcmp.lt.s32.totalorder %v69, 56
    %v134 = vld [vmem:[%s0] sm:$0xff]
    %v135 = vld [vmem:[%s0 + $0x8] sm:$0xff]
    %v136 = vld [vmem:[%s0 + $0x10] sm:$0xff]
    %v137 = vld [vmem:[%s0 + $0x18] sm:$0xff]
    %v138 = vld [vmem:[%s0 + $0x20] sm:$0xff]
    %v139 = vld [vmem:[%s0 + $0x28] sm:$0xff]
    %v140 = vld [vmem:[%s0 + $0x30] sm:$0xff]
    %v141 = vld [vmem:[%s0 + $0x38] sm:$0xff]
    %v142 = vld [vmem:[%s0 + $0x40] sm:$0xff]
    %v143 = vld [vmem:[%s0 + $0x48] sm:$0xff]
    %v144 = vld [vmem:[%s0 + $0x50] sm:$0xff]
    %v145 = vld [vmem:[%s0 + $0x58] sm:$0xff]
    %v146 = vld [vmem:[%s0 + $0x60] sm:$0xff]
    %v147 = vld [vmem:[%s0 + $0x68] sm:$0xff]
    %v148 = vld [vmem:[%s0 + $0x70] sm:$0xff]
    %v149 = vld [vmem:[%s0 + $0x78] sm:$0xff]
    %v150 = vrot.slane %v134, 7
    %v151 = vrot.slane %v135, 7
    %v152 = vrot.slane %v136, 7
    %v153 = vrot.slane %v137, 7
    %v154 = vrot.slane %v138, 7
    %v155 = vrot.slane %v139, 7
    %v156 = vrot.slane %v140, 7
    %v157 = vrot.slane %v141, 7
    %v158 = vrot.slane %v142, 7
    %v159 = vrot.slane %v143, 7
    %v160 = vrot.slane %v144, 7
    %v161 = vrot.slane %v145, 7
    %v162 = vrot.slane %v146, 7
    %v163 = vrot.slane %v147, 7
    %v164 = vrot.slane %v148, 7
    %v165 = vrot.slane %v149, 7
    %vm166 = vcmp.lt.s32.totalorder %v22, 1
    %v167 = vsel %vm166, %v164, %v165
    %v168 = vsel %vm166, %v163, %v164
    %v169 = vsel %vm166, %v162, %v163
    %v170 = vsel %vm166, %v161, %v162
    %v171 = vsel %vm166, %v160, %v161
    %v172 = vsel %vm166, %v159, %v160
    %v173 = vsel %vm166, %v158, %v159
    %v174 = vsel %vm166, %v157, %v158
    %v175 = vsel %vm166, %v156, %v157
    %v176 = vsel %vm166, %v155, %v156
    %v177 = vsel %vm166, %v154, %v155
    %v178 = vsel %vm166, %v153, %v154
    %v179 = vsel %vm166, %v152, %v153
    %v180 = vsel %vm166, %v151, %v152
    %v181 = vsel %vm166, %v150, %v151
    %v182 = vsel %vm166, %v165, %v150
    %vm183 = vmand %vm102, %vm70
    %vm184 = vmand %vm103, %vm71
    %vm185 = vmand %vm104, %vm72
    %vm186 = vmand %vm105, %vm73
    %vm187 = vmand %vm106, %vm74
    %vm188 = vmand %vm107, %vm75
    %vm189 = vmand %vm108, %vm76
    %vm190 = vmand %vm109, %vm77
    %vm191 = vmand %vm110, %vm78
    %vm192 = vmand %vm111, %vm79
    %vm193 = vmand %vm112, %vm80
    %vm194 = vmand %vm113, %vm81
    %vm195 = vmand %vm114, %vm82
    %vm196 = vmand %vm115, %vm83
    %vm197 = vmand %vm116, %vm84
    %vm198 = vmand %vm117, %vm85
    %v199 = vsel %vm183, %v167, 0.0
    %v200 = vsel %vm184, %v182, 0.0
    %v201 = vsel %vm185, %v181, 0.0
    %v202 = vsel %vm186, %v180, 0.0
    %v203 = vsel %vm187, %v179, 0.0
    %v204 = vsel %vm188, %v178, 0.0
    %v205 = vsel %vm189, %v177, 0.0
    %v206 = vsel %vm190, %v176, 0.0
    %v207 = vsel %vm191, %v175, 0.0
    %v208 = vsel %vm192, %v174, 0.0
    %v209 = vsel %vm193, %v173, 0.0
    %v210 = vsel %vm194, %v172, 0.0
    %v211 = vsel %vm195, %v171, 0.0
    %v212 = vsel %vm196, %v170, 0.0
    %v213 = vsel %vm197, %v169, 0.0
    %v214 = vsel %vm198, %v168, 0.0
    %v215 = vsel %vm102, %v149, 0.0
    %v216 = vsel %vm103, %v134, 0.0
    %v217 = vsel %vm104, %v135, 0.0
    %v218 = vsel %vm105, %v136, 0.0
    %v219 = vsel %vm106, %v137, 0.0
    %v220 = vsel %vm107, %v138, 0.0
    %v221 = vsel %vm108, %v139, 0.0
    %v222 = vsel %vm109, %v140, 0.0
    %v223 = vsel %vm110, %v141, 0.0
    %v224 = vsel %vm111, %v142, 0.0
    %v225 = vsel %vm112, %v143, 0.0
    %v226 = vsel %vm113, %v144, 0.0
    %v227 = vsel %vm114, %v145, 0.0
    %v228 = vsel %vm115, %v146, 0.0
    %v229 = vsel %vm116, %v147, 0.0
    %v230 = vsel %vm117, %v148, 0.0
    %v231 = vrot.slane %v134, 1
    %v232 = vrot.slane %v135, 1
    %v233 = vrot.slane %v136, 1
    %v234 = vrot.slane %v137, 1
    %v235 = vrot.slane %v138, 1
    %v236 = vrot.slane %v139, 1
    %v237 = vrot.slane %v140, 1
    %v238 = vrot.slane %v141, 1
    %v239 = vrot.slane %v142, 1
    %v240 = vrot.slane %v143, 1
    %v241 = vrot.slane %v144, 1
    %v242 = vrot.slane %v145, 1
    %v243 = vrot.slane %v146, 1
    %v244 = vrot.slane %v147, 1
    %v245 = vrot.slane %v148, 1
    %v246 = vrot.slane %v149, 1
    %vm247 = vcmp.lt.s32.totalorder %v22, 7
    %v248 = vsel %vm247, %v245, %v246
    %v249 = vsel %vm247, %v244, %v245
    %v250 = vsel %vm247, %v243, %v244
    %v251 = vsel %vm247, %v242, %v243
    %v252 = vsel %vm247, %v241, %v242
    %v253 = vsel %vm247, %v240, %v241
    %v254 = vsel %vm247, %v239, %v240
    %v255 = vsel %vm247, %v238, %v239
    %v256 = vsel %vm247, %v237, %v238
    %v257 = vsel %vm247, %v236, %v237
    %v258 = vsel %vm247, %v235, %v236
    %v259 = vsel %vm247, %v234, %v235
    %v260 = vsel %vm247, %v233, %v234
    %v261 = vsel %vm247, %v232, %v233
    %v262 = vsel %vm247, %v231, %v232
    %v263 = vsel %vm247, %v246, %v231
    %vm264 = vmand %vm102, %vm86
    %vm265 = vmand %vm103, %vm87
    %vm266 = vmand %vm104, %vm88
    %vm267 = vmand %vm105, %vm89
    %vm268 = vmand %vm106, %vm90
    %vm269 = vmand %vm107, %vm91
    %vm270 = vmand %vm108, %vm92
    %vm271 = vmand %vm109, %vm93
    %vm272 = vmand %vm110, %vm94
    %vm273 = vmand %vm111, %vm95
    %vm274 = vmand %vm112, %vm96
    %vm275 = vmand %vm113, %vm97
    %vm276 = vmand %vm114, %vm98
    %vm277 = vmand %vm115, %vm99
    %vm278 = vmand %vm116, %vm100
    %vm279 = vmand %vm117, %vm101
    %v280 = vsel %vm264, %v263, 0.0
    %v281 = vsel %vm265, %v262, 0.0
    %v282 = vsel %vm266, %v261, 0.0
    %v283 = vsel %vm267, %v260, 0.0
    %v284 = vsel %vm268, %v259, 0.0
    %v285 = vsel %vm269, %v258, 0.0
    %v286 = vsel %vm270, %v257, 0.0
    %v287 = vsel %vm271, %v256, 0.0
    %v288 = vsel %vm272, %v255, 0.0
    %v289 = vsel %vm273, %v254, 0.0
    %v290 = vsel %vm274, %v253, 0.0
    %v291 = vsel %vm275, %v252, 0.0
    %v292 = vsel %vm276, %v251, 0.0
    %v293 = vsel %vm277, %v250, 0.0
    %v294 = vsel %vm278, %v249, 0.0
    %v295 = vsel %vm279, %v248, 0.0
    %v296 = vsel %vm70, %v182, 0.0
    %v297 = vsel %vm71, %v181, 0.0
    %v298 = vsel %vm72, %v180, 0.0
    %v299 = vsel %vm73, %v179, 0.0
    %v300 = vsel %vm74, %v178, 0.0
    %v301 = vsel %vm75, %v177, 0.0
    %v302 = vsel %vm76, %v176, 0.0
    %v303 = vsel %vm77, %v175, 0.0
    %v304 = vsel %vm78, %v174, 0.0
    %v305 = vsel %vm79, %v173, 0.0
    %v306 = vsel %vm80, %v172, 0.0
    %v307 = vsel %vm81, %v171, 0.0
    %v308 = vsel %vm82, %v170, 0.0
    %v309 = vsel %vm83, %v169, 0.0
    %v310 = vsel %vm84, %v168, 0.0
    %v311 = vsel %vm85, %v167, 0.0
    %v312 = vsel %vm86, %v262, 0.0
    %v313 = vsel %vm87, %v261, 0.0
    %v314 = vsel %vm88, %v260, 0.0
    %v315 = vsel %vm89, %v259, 0.0
    %v316 = vsel %vm90, %v258, 0.0
    %v317 = vsel %vm91, %v257, 0.0
    %v318 = vsel %vm92, %v256, 0.0
    %v319 = vsel %vm93, %v255, 0.0
    %v320 = vsel %vm94, %v254, 0.0
    %v321 = vsel %vm95, %v253, 0.0
    %v322 = vsel %vm96, %v252, 0.0
    %v323 = vsel %vm97, %v251, 0.0
    %v324 = vsel %vm98, %v250, 0.0
    %v325 = vsel %vm99, %v249, 0.0
    %v326 = vsel %vm100, %v248, 0.0
    %v327 = vsel %vm101, %v263, 0.0
    %vm328 = vmand %vm118, %vm70
    %vm329 = vmand %vm119, %vm71
    %vm330 = vmand %vm120, %vm72
    %vm331 = vmand %vm121, %vm73
    %vm332 = vmand %vm122, %vm74
    %vm333 = vmand %vm123, %vm75
    %vm334 = vmand %vm124, %vm76
    %vm335 = vmand %vm125, %vm77
    %vm336 = vmand %vm126, %vm78
    %vm337 = vmand %vm127, %vm79
    %vm338 = vmand %vm128, %vm80
    %vm339 = vmand %vm129, %vm81
    %vm340 = vmand %vm130, %vm82
    %vm341 = vmand %vm131, %vm83
    %vm342 = vmand %vm132, %vm84
    %vm343 = vmand %vm133, %vm85
    %v344 = vsel %vm328, %v181, 0.0
    %v345 = vsel %vm329, %v180, 0.0
    %v346 = vsel %vm330, %v179, 0.0
    %v347 = vsel %vm331, %v178, 0.0
    %v348 = vsel %vm332, %v177, 0.0
    %v349 = vsel %vm333, %v176, 0.0
    %v350 = vsel %vm334, %v175, 0.0
    %v351 = vsel %vm335, %v174, 0.0
    %v352 = vsel %vm336, %v173, 0.0
    %v353 = vsel %vm337, %v172, 0.0
    %v354 = vsel %vm338, %v171, 0.0
    %v355 = vsel %vm339, %v170, 0.0
    %v356 = vsel %vm340, %v169, 0.0
    %v357 = vsel %vm341, %v168, 0.0
    %v358 = vsel %vm342, %v167, 0.0
    %v359 = vsel %vm343, %v182, 0.0
    %v360 = vsel %vm118, %v135, 0.0
    %v361 = vsel %vm119, %v136, 0.0
    %v362 = vsel %vm120, %v137, 0.0
    %v363 = vsel %vm121, %v138, 0.0
    %v364 = vsel %vm122, %v139, 0.0
    %v365 = vsel %vm123, %v140, 0.0
    %v366 = vsel %vm124, %v141, 0.0
    %v367 = vsel %vm125, %v142, 0.0
    %v368 = vsel %vm126, %v143, 0.0
    %v369 = vsel %vm127, %v144, 0.0
    %v370 = vsel %vm128, %v145, 0.0
    %v371 = vsel %vm129, %v146, 0.0
    %v372 = vsel %vm130, %v147, 0.0
    %v373 = vsel %vm131, %v148, 0.0
    %v374 = vsel %vm132, %v149, 0.0
    %v375 = vsel %vm133, %v134, 0.0
    %vm376 = vmand %vm118, %vm86
    %vm377 = vmand %vm119, %vm87
    %vm378 = vmand %vm120, %vm88
    %vm379 = vmand %vm121, %vm89
    %vm380 = vmand %vm122, %vm90
    %vm381 = vmand %vm123, %vm91
    %vm382 = vmand %vm124, %vm92
    %vm383 = vmand %vm125, %vm93
    %vm384 = vmand %vm126, %vm94
    %vm385 = vmand %vm127, %vm95
    %vm386 = vmand %vm128, %vm96
    %vm387 = vmand %vm129, %vm97
    %vm388 = vmand %vm130, %vm98
    %vm389 = vmand %vm131, %vm99
    %vm390 = vmand %vm132, %vm100
    %vm391 = vmand %vm133, %vm101
    %v392 = vsel %vm376, %v261, 0.0
    %v393 = vsel %vm377, %v260, 0.0
    %v394 = vsel %vm378, %v259, 0.0
    %v395 = vsel %vm379, %v258, 0.0
    %v396 = vsel %vm380, %v257, 0.0
    %v397 = vsel %vm381, %v256, 0.0
    %v398 = vsel %vm382, %v255, 0.0
    %v399 = vsel %vm383, %v254, 0.0
    %v400 = vsel %vm384, %v253, 0.0
    %v401 = vsel %vm385, %v252, 0.0
    %v402 = vsel %vm386, %v251, 0.0
    %v403 = vsel %vm387, %v250, 0.0
    %v404 = vsel %vm388, %v249, 0.0
    %v405 = vsel %vm389, %v248, 0.0
    %v406 = vsel %vm390, %v263, 0.0
    %v407 = vsel %vm391, %v262, 0.0
    %424 = vrot.lane.b32.xlu0 %v215, 64
    %v425 = vpop.permute.xlu0 %424
    %426 = vrot.lane.b32.xlu0 %v216, 64
    %v427 = vpop.permute.xlu0 %426
    %428 = vrot.lane.b32.xlu0 %v217, 64
    %v429 = vpop.permute.xlu0 %428
    %430 = vrot.lane.b32.xlu0 %v218, 64
    %v431 = vpop.permute.xlu0 %430
    %432 = vrot.lane.b32.xlu0 %v219, 64
    %v433 = vpop.permute.xlu0 %432
    %434 = vrot.lane.b32.xlu0 %v220, 64
    %v435 = vpop.permute.xlu0 %434
    %436 = vrot.lane.b32.xlu0 %v221, 64
    %v437 = vpop.permute.xlu0 %436
    %438 = vrot.lane.b32.xlu0 %v222, 64
    %v439 = vpop.permute.xlu0 %438
    %440 = vrot.lane.b32.xlu0 %v223, 64
    %v441 = vpop.permute.xlu0 %440
    %442 = vrot.lane.b32.xlu0 %v224, 64
    %v443 = vpop.permute.xlu0 %442
    %444 = vrot.lane.b32.xlu0 %v225, 64
    %v445 = vpop.permute.xlu0 %444
    %446 = vrot.lane.b32.xlu0 %v226, 64
    %v447 = vpop.permute.xlu0 %446
    %448 = vrot.lane.b32.xlu0 %v227, 64
    %v449 = vpop.permute.xlu0 %448
    %450 = vrot.lane.b32.xlu0 %v228, 64
    %v451 = vpop.permute.xlu0 %450
    %452 = vrot.lane.b32.xlu0 %v229, 64
    %v453 = vpop.permute.xlu0 %452
    %454 = vrot.lane.b32.xlu0 %v230, 64
    %v455 = vpop.permute.xlu0 %454
    %vm472 = vcmask 523264
    %v473 = vsel %vm472, %v199, %v425
    %v474 = vsel %vm472, %v200, %v427
    %v475 = vsel %vm472, %v201, %v429
    %v476 = vsel %vm472, %v202, %v431
    %v477 = vsel %vm472, %v203, %v433
    %v478 = vsel %vm472, %v204, %v435
    %v479 = vsel %vm472, %v205, %v437
    %v480 = vsel %vm472, %v206, %v439
    %v481 = vsel %vm472, %v207, %v441
    %v482 = vsel %vm472, %v208, %v443
    %v483 = vsel %vm472, %v209, %v445
    %v484 = vsel %vm472, %v210, %v447
    %v485 = vsel %vm472, %v211, %v449
    %v486 = vsel %vm472, %v212, %v451
    %v487 = vsel %vm472, %v213, %v453
    %v488 = vsel %vm472, %v214, %v455
    %489 = vst [vmem:[#allocation2] sm:$0xff] %v473
    %490 = vst [vmem:[#allocation2 + $0x28] sm:$0xff] %v474
    %491 = vst [vmem:[#allocation2 + $0x50] sm:$0xff] %v475
    %492 = vst [vmem:[#allocation2 + $0x78] sm:$0xff] %v476
    %493 = vst [vmem:[#allocation2 + $0xa0] sm:$0xff] %v477
    %494 = vst [vmem:[#allocation2 + $0xc8] sm:$0xff] %v478
    %495 = vst [vmem:[#allocation2 + $0xf0] sm:$0xff] %v479
    %496 = vst [vmem:[#allocation2 + $0x118] sm:$0xff] %v480
    %497 = vst [vmem:[#allocation2 + $0x140] sm:$0xff] %v481
    %498 = vst [vmem:[#allocation2 + $0x168] sm:$0xff] %v482
    %499 = vst [vmem:[#allocation2 + $0x190] sm:$0xff] %v483
    %500 = vst [vmem:[#allocation2 + $0x1b8] sm:$0xff] %v484
    %501 = vst [vmem:[#allocation2 + $0x1e0] sm:$0xff] %v485
    %502 = vst [vmem:[#allocation2 + $0x208] sm:$0xff] %v486
    %503 = vst [vmem:[#allocation2 + $0x230] sm:$0xff] %v487
    %504 = vst [vmem:[#allocation2 + $0x258] sm:$0xff] %v488
    %521 = vrot.lane.b32.xlu0 %v296, 64
    %v522 = vpop.permute.xlu0 %521
    %523 = vrot.lane.b32.xlu0 %v297, 64
    %v524 = vpop.permute.xlu0 %523
    %525 = vrot.lane.b32.xlu0 %v298, 64
    %v526 = vpop.permute.xlu0 %525
    %527 = vrot.lane.b32.xlu0 %v299, 64
    %v528 = vpop.permute.xlu0 %527
    %529 = vrot.lane.b32.xlu0 %v300, 64
    %v530 = vpop.permute.xlu0 %529
    %531 = vrot.lane.b32.xlu0 %v301, 64
    %v532 = vpop.permute.xlu0 %531
    %533 = vrot.lane.b32.xlu0 %v302, 64
    %v534 = vpop.permute.xlu0 %533
    %535 = vrot.lane.b32.xlu0 %v303, 64
    %v536 = vpop.permute.xlu0 %535
    %537 = vrot.lane.b32.xlu0 %v304, 64
    %v538 = vpop.permute.xlu0 %537
    %539 = vrot.lane.b32.xlu0 %v305, 64
    %v540 = vpop.permute.xlu0 %539
    %541 = vrot.lane.b32.xlu0 %v306, 64
    %v542 = vpop.permute.xlu0 %541
    %543 = vrot.lane.b32.xlu0 %v307, 64
    %v544 = vpop.permute.xlu0 %543
    %545 = vrot.lane.b32.xlu0 %v308, 64
    %v546 = vpop.permute.xlu0 %545
    %547 = vrot.lane.b32.xlu0 %v309, 64
    %v548 = vpop.permute.xlu0 %547
    %549 = vrot.lane.b32.xlu0 %v310, 64
    %v550 = vpop.permute.xlu0 %549
    %551 = vrot.lane.b32.xlu0 %v311, 64
    %v552 = vpop.permute.xlu0 %551
    %v569 = vsel %vm472, %v280, %v522
    %v570 = vsel %vm472, %v281, %v524
    %v571 = vsel %vm472, %v282, %v526
    %v572 = vsel %vm472, %v283, %v528
    %v573 = vsel %vm472, %v284, %v530
    %v574 = vsel %vm472, %v285, %v532
    %v575 = vsel %vm472, %v286, %v534
    %v576 = vsel %vm472, %v287, %v536
    %v577 = vsel %vm472, %v288, %v538
    %v578 = vsel %vm472, %v289, %v540
    %v579 = vsel %vm472, %v290, %v542
    %v580 = vsel %vm472, %v291, %v544
    %v581 = vsel %vm472, %v292, %v546
    %v582 = vsel %vm472, %v293, %v548
    %v583 = vsel %vm472, %v294, %v550
    %v584 = vsel %vm472, %v295, %v552
    %585 = vst [vmem:[#allocation2 + $0x8] sm:$0xff] %v569
    %586 = vst [vmem:[#allocation2 + $0x30] sm:$0xff] %v570
    %587 = vst [vmem:[#allocation2 + $0x58] sm:$0xff] %v571
    %588 = vst [vmem:[#allocation2 + $0x80] sm:$0xff] %v572
    %589 = vst [vmem:[#allocation2 + $0xa8] sm:$0xff] %v573
    %590 = vst [vmem:[#allocation2 + $0xd0] sm:$0xff] %v574
    %591 = vst [vmem:[#allocation2 + $0xf8] sm:$0xff] %v575
    %592 = vst [vmem:[#allocation2 + $0x120] sm:$0xff] %v576
    %593 = vst [vmem:[#allocation2 + $0x148] sm:$0xff] %v577
    %594 = vst [vmem:[#allocation2 + $0x170] sm:$0xff] %v578
    %595 = vst [vmem:[#allocation2 + $0x198] sm:$0xff] %v579
    %596 = vst [vmem:[#allocation2 + $0x1c0] sm:$0xff] %v580
    %597 = vst [vmem:[#allocation2 + $0x1e8] sm:$0xff] %v581
    %598 = vst [vmem:[#allocation2 + $0x210] sm:$0xff] %v582
    %599 = vst [vmem:[#allocation2 + $0x238] sm:$0xff] %v583
    %600 = vst [vmem:[#allocation2 + $0x260] sm:$0xff] %v584
    %617 = vrot.lane.b32.xlu0 %v312, 64
    %v618 = vpop.permute.xlu0 %617
    %619 = vrot.lane.b32.xlu0 %v313, 64
    %v620 = vpop.permute.xlu0 %619
    %621 = vrot.lane.b32.xlu0 %v314, 64
    %v622 = vpop.permute.xlu0 %621
    %623 = vrot.lane.b32.xlu0 %v315, 64
    %v624 = vpop.permute.xlu0 %623
    %625 = vrot.lane.b32.xlu0 %v316, 64
    %v626 = vpop.permute.xlu0 %625
    %627 = vrot.lane.b32.xlu0 %v317, 64
    %v628 = vpop.permute.xlu0 %627
    %629 = vrot.lane.b32.xlu0 %v318, 64
    %v630 = vpop.permute.xlu0 %629
    %631 = vrot.lane.b32.xlu0 %v319, 64
    %v632 = vpop.permute.xlu0 %631
    %633 = vrot.lane.b32.xlu0 %v320, 64
    %v634 = vpop.permute.xlu0 %633
    %635 = vrot.lane.b32.xlu0 %v321, 64
    %v636 = vpop.permute.xlu0 %635
    %637 = vrot.lane.b32.xlu0 %v322, 64
    %v638 = vpop.permute.xlu0 %637
    %639 = vrot.lane.b32.xlu0 %v323, 64
    %v640 = vpop.permute.xlu0 %639
    %641 = vrot.lane.b32.xlu0 %v324, 64
    %v642 = vpop.permute.xlu0 %641
    %643 = vrot.lane.b32.xlu0 %v325, 64
    %v644 = vpop.permute.xlu0 %643
    %645 = vrot.lane.b32.xlu0 %v326, 64
    %v646 = vpop.permute.xlu0 %645
    %647 = vrot.lane.b32.xlu0 %v327, 64
    %v648 = vpop.permute.xlu0 %647
    %v665 = vsel %vm472, %v134, %v618
    %v666 = vsel %vm472, %v135, %v620
    %v667 = vsel %vm472, %v136, %v622
    %v668 = vsel %vm472, %v137, %v624
    %v669 = vsel %vm472, %v138, %v626
    %v670 = vsel %vm472, %v139, %v628
    %v671 = vsel %vm472, %v140, %v630
    %v672 = vsel %vm472, %v141, %v632
    %v673 = vsel %vm472, %v142, %v634
    %v674 = vsel %vm472, %v143, %v636
    %v675 = vsel %vm472, %v144, %v638
    %v676 = vsel %vm472, %v145, %v640
    %v677 = vsel %vm472, %v146, %v642
    %v678 = vsel %vm472, %v147, %v644
    %v679 = vsel %vm472, %v148, %v646
    %v680 = vsel %vm472, %v149, %v648
    %681 = vst [vmem:[#allocation2 + $0x10] sm:$0xff] %v665
    %682 = vst [vmem:[#allocation2 + $0x38] sm:$0xff] %v666
    %683 = vst [vmem:[#allocation2 + $0x60] sm:$0xff] %v667
    %684 = vst [vmem:[#allocation2 + $0x88] sm:$0xff] %v668
    %685 = vst [vmem:[#allocation2 + $0xb0] sm:$0xff] %v669
    %686 = vst [vmem:[#allocation2 + $0xd8] sm:$0xff] %v670
    %687 = vst [vmem:[#allocation2 + $0x100] sm:$0xff] %v671
    %688 = vst [vmem:[#allocation2 + $0x128] sm:$0xff] %v672
    %689 = vst [vmem:[#allocation2 + $0x150] sm:$0xff] %v673
    %690 = vst [vmem:[#allocation2 + $0x178] sm:$0xff] %v674
    %691 = vst [vmem:[#allocation2 + $0x1a0] sm:$0xff] %v675
    %692 = vst [vmem:[#allocation2 + $0x1c8] sm:$0xff] %v676
    %693 = vst [vmem:[#allocation2 + $0x1f0] sm:$0xff] %v677
    %694 = vst [vmem:[#allocation2 + $0x218] sm:$0xff] %v678
    %695 = vst [vmem:[#allocation2 + $0x240] sm:$0xff] %v679
    %696 = vst [vmem:[#allocation2 + $0x268] sm:$0xff] %v680
    %713 = vrot.lane.b32.xlu0 %v360, 64
    %v714 = vpop.permute.xlu0 %713
    %715 = vrot.lane.b32.xlu0 %v361, 64
    %v716 = vpop.permute.xlu0 %715
    %717 = vrot.lane.b32.xlu0 %v362, 64
    %v718 = vpop.permute.xlu0 %717
    %719 = vrot.lane.b32.xlu0 %v363, 64
    %v720 = vpop.permute.xlu0 %719
    %721 = vrot.lane.b32.xlu0 %v364, 64
    %v722 = vpop.permute.xlu0 %721
    %723 = vrot.lane.b32.xlu0 %v365, 64
    %v724 = vpop.permute.xlu0 %723
    %725 = vrot.lane.b32.xlu0 %v366, 64
    %v726 = vpop.permute.xlu0 %725
    %727 = vrot.lane.b32.xlu0 %v367, 64
    %v728 = vpop.permute.xlu0 %727
    %729 = vrot.lane.b32.xlu0 %v368, 64
    %v730 = vpop.permute.xlu0 %729
    %731 = vrot.lane.b32.xlu0 %v369, 64
    %v732 = vpop.permute.xlu0 %731
    %733 = vrot.lane.b32.xlu0 %v370, 64
    %v734 = vpop.permute.xlu0 %733
    %735 = vrot.lane.b32.xlu0 %v371, 64
    %v736 = vpop.permute.xlu0 %735
    %737 = vrot.lane.b32.xlu0 %v372, 64
    %v738 = vpop.permute.xlu0 %737
    %739 = vrot.lane.b32.xlu0 %v373, 64
    %v740 = vpop.permute.xlu0 %739
    %741 = vrot.lane.b32.xlu0 %v374, 64
    %v742 = vpop.permute.xlu0 %741
    %743 = vrot.lane.b32.xlu0 %v375, 64
    %v744 = vpop.permute.xlu0 %743
    %v761 = vsel %vm472, %v344, %v714
    %v762 = vsel %vm472, %v345, %v716
    %v763 = vsel %vm472, %v346, %v718
    %v764 = vsel %vm472, %v347, %v720
    %v765 = vsel %vm472, %v348, %v722
    %v766 = vsel %vm472, %v349, %v724
    %v767 = vsel %vm472, %v350, %v726
    %v768 = vsel %vm472, %v351, %v728
    %v769 = vsel %vm472, %v352, %v730
    %v770 = vsel %vm472, %v353, %v732
    %v771 = vsel %vm472, %v354, %v734
    %v772 = vsel %vm472, %v355, %v736
    %v773 = vsel %vm472, %v356, %v738
    %v774 = vsel %vm472, %v357, %v740
    %v775 = vsel %vm472, %v358, %v742
    %v776 = vsel %vm472, %v359, %v744
    %777 = vst [vmem:[#allocation2 + $0x18] sm:$0xff] %v761
    %778 = vst [vmem:[#allocation2 + $0x40] sm:$0xff] %v762
    %779 = vst [vmem:[#allocation2 + $0x68] sm:$0xff] %v763
    %780 = vst [vmem:[#allocation2 + $0x90] sm:$0xff] %v764
    %781 = vst [vmem:[#allocation2 + $0xb8] sm:$0xff] %v765
    %782 = vst [vmem:[#allocation2 + $0xe0] sm:$0xff] %v766
    %783 = vst [vmem:[#allocation2 + $0x108] sm:$0xff] %v767
    %784 = vst [vmem:[#allocation2 + $0x130] sm:$0xff] %v768
    %785 = vst [vmem:[#allocation2 + $0x158] sm:$0xff] %v769
    %786 = vst [vmem:[#allocation2 + $0x180] sm:$0xff] %v770
    %787 = vst [vmem:[#allocation2 + $0x1a8] sm:$0xff] %v771
    %788 = vst [vmem:[#allocation2 + $0x1d0] sm:$0xff] %v772
    %789 = vst [vmem:[#allocation2 + $0x1f8] sm:$0xff] %v773
    %790 = vst [vmem:[#allocation2 + $0x220] sm:$0xff] %v774
    %791 = vst [vmem:[#allocation2 + $0x248] sm:$0xff] %v775
    %792 = vst [vmem:[#allocation2 + $0x270] sm:$0xff] %v776
    %793 = vst.msk [vmem:[#allocation2 + $0x20] sm:$0xff] %vm472, %v392
    %794 = vst.msk [vmem:[#allocation2 + $0x48] sm:$0xff] %vm472, %v393
    %795 = vst.msk [vmem:[#allocation2 + $0x70] sm:$0xff] %vm472, %v394
    %796 = vst.msk [vmem:[#allocation2 + $0x98] sm:$0xff] %vm472, %v395
    %797 = vst.msk [vmem:[#allocation2 + $0xc0] sm:$0xff] %vm472, %v396
    %798 = vst.msk [vmem:[#allocation2 + $0xe8] sm:$0xff] %vm472, %v397
    %799 = vst.msk [vmem:[#allocation2 + $0x110] sm:$0xff] %vm472, %v398
    %800 = vst.msk [vmem:[#allocation2 + $0x138] sm:$0xff] %vm472, %v399
    %801 = vst.msk [vmem:[#allocation2 + $0x160] sm:$0xff] %vm472, %v400
    %802 = vst.msk [vmem:[#allocation2 + $0x188] sm:$0xff] %vm472, %v401
    %803 = vst.msk [vmem:[#allocation2 + $0x1b0] sm:$0xff] %vm472, %v402
    %804 = vst.msk [vmem:[#allocation2 + $0x1d8] sm:$0xff] %vm472, %v403
    %805 = vst.msk [vmem:[#allocation2 + $0x200] sm:$0xff] %vm472, %v404
    %806 = vst.msk [vmem:[#allocation2 + $0x228] sm:$0xff] %vm472, %v405
    %807 = vst.msk [vmem:[#allocation2 + $0x250] sm:$0xff] %vm472, %v406
    %808 = vst.msk [vmem:[#allocation2 + $0x278] sm:$0xff] %vm472, %v407
    %v809 = vld [vmem:[#allocation2] sm:$0xff]
    %v810 = vld [vmem:[#allocation2 + $0x8] sm:$0xff]
    %v811 = vld [vmem:[#allocation2 + $0x10] sm:$0xff]
    %v812 = vld [vmem:[#allocation2 + $0x18] sm:$0xff]
    %v813 = vld [vmem:[#allocation2 + $0x20] sm:$0xff]
    %v814 = vld [vmem:[#allocation2 + $0x28] sm:$0xff]
    %v815 = vld [vmem:[#allocation2 + $0x30] sm:$0xff]
    %v816 = vld [vmem:[#allocation2 + $0x38] sm:$0xff]
    %v817 = vld [vmem:[#allocation2 + $0x40] sm:$0xff]
    %v818 = vld [vmem:[#allocation2 + $0x48] sm:$0xff]
    %v819 = vld [vmem:[#allocation2 + $0x50] sm:$0xff]
    %v820 = vld [vmem:[#allocation2 + $0x58] sm:$0xff]
    %v821 = vld [vmem:[#allocation2 + $0x60] sm:$0xff]
    %v822 = vld [vmem:[#allocation2 + $0x68] sm:$0xff]
    %v823 = vld [vmem:[#allocation2 + $0x70] sm:$0xff]
    %v824 = vld [vmem:[#allocation2 + $0x78] sm:$0xff]
    %v825 = vld [vmem:[#allocation2 + $0x80] sm:$0xff]
    %v826 = vld [vmem:[#allocation2 + $0x88] sm:$0xff]
    %v827 = vld [vmem:[#allocation2 + $0x90] sm:$0xff]
    %v828 = vld [vmem:[#allocation2 + $0x98] sm:$0xff]
    %v829 = vld [vmem:[#allocation2 + $0xa0] sm:$0xff]
    %v830 = vld [vmem:[#allocation2 + $0xa8] sm:$0xff]
    %v831 = vld [vmem:[#allocation2 + $0xb0] sm:$0xff]
    %v832 = vld [vmem:[#allocation2 + $0xb8] sm:$0xff]
    %v833 = vld [vmem:[#allocation2 + $0xc0] sm:$0xff]
    %v834 = vld [vmem:[#allocation2 + $0xc8] sm:$0xff]
    %v835 = vld [vmem:[#allocation2 + $0xd0] sm:$0xff]
    %v836 = vld [vmem:[#allocation2 + $0xd8] sm:$0xff]
    %v837 = vld [vmem:[#allocation2 + $0xe0] sm:$0xff]
    %v838 = vld [vmem:[#allocation2 + $0xe8] sm:$0xff]
    %v839 = vld [vmem:[#allocation2 + $0xf0] sm:$0xff]
    %v840 = vld [vmem:[#allocation2 + $0xf8] sm:$0xff]
    %v841 = vld [vmem:[#allocation2 + $0x100] sm:$0xff]
    %v842 = vld [vmem:[#allocation2 + $0x108] sm:$0xff]
    %v843 = vld [vmem:[#allocation2 + $0x110] sm:$0xff]
    %v844 = vld [vmem:[#allocation2 + $0x118] sm:$0xff]
    %v845 = vld [vmem:[#allocation2 + $0x120] sm:$0xff]
    %v846 = vld [vmem:[#allocation2 + $0x128] sm:$0xff]
    %v847 = vld [vmem:[#allocation2 + $0x130] sm:$0xff]
    %v848 = vld [vmem:[#allocation2 + $0x138] sm:$0xff]
    %v849 = vld [vmem:[#allocation2 + $0x140] sm:$0xff]
    %v850 = vld [vmem:[#allocation2 + $0x148] sm:$0xff]
    %v851 = vld [vmem:[#allocation2 + $0x150] sm:$0xff]
    %v852 = vld [vmem:[#allocation2 + $0x158] sm:$0xff]
    %v853 = vld [vmem:[#allocation2 + $0x160] sm:$0xff]
    %v854 = vld [vmem:[#allocation2 + $0x168] sm:$0xff]
    %v855 = vld [vmem:[#allocation2 + $0x170] sm:$0xff]
    %v856 = vld [vmem:[#allocation2 + $0x178] sm:$0xff]
    %v857 = vld [vmem:[#allocation2 + $0x180] sm:$0xff]
    %v858 = vld [vmem:[#allocation2 + $0x188] sm:$0xff]
    %v859 = vld [vmem:[#allocation2 + $0x190] sm:$0xff]
    %v860 = vld [vmem:[#allocation2 + $0x198] sm:$0xff]
    %v861 = vld [vmem:[#allocation2 + $0x1a0] sm:$0xff]
    %v862 = vld [vmem:[#allocation2 + $0x1a8] sm:$0xff]
    %v863 = vld [vmem:[#allocation2 + $0x1b0] sm:$0xff]
    %v864 = vld [vmem:[#allocation2 + $0x1b8] sm:$0xff]
    %v865 = vld [vmem:[#allocation2 + $0x1c0] sm:$0xff]
    %v866 = vld [vmem:[#allocation2 + $0x1c8] sm:$0xff]
    %v867 = vld [vmem:[#allocation2 + $0x1d0] sm:$0xff]
    %v868 = vld [vmem:[#allocation2 + $0x1d8] sm:$0xff]
    %v869 = vld [vmem:[#allocation2 + $0x1e0] sm:$0xff]
    %v870 = vld [vmem:[#allocation2 + $0x1e8] sm:$0xff]
    %v871 = vld [vmem:[#allocation2 + $0x1f0] sm:$0xff]
    %v872 = vld [vmem:[#allocation2 + $0x1f8] sm:$0xff]
    %v873 = vld [vmem:[#allocation2 + $0x200] sm:$0xff]
    %v874 = vld [vmem:[#allocation2 + $0x208] sm:$0xff]
    %v875 = vld [vmem:[#allocation2 + $0x210] sm:$0xff]
    %v876 = vld [vmem:[#allocation2 + $0x218] sm:$0xff]
    %v877 = vld [vmem:[#allocation2 + $0x220] sm:$0xff]
    %v878 = vld [vmem:[#allocation2 + $0x228] sm:$0xff]
    %v879 = vld [vmem:[#allocation2 + $0x230] sm:$0xff]
    %v880 = vld [vmem:[#allocation2 + $0x238] sm:$0xff]
    %v881 = vld [vmem:[#allocation2 + $0x240] sm:$0xff]
    %v882 = vld [vmem:[#allocation2 + $0x248] sm:$0xff]
    %v883 = vld [vmem:[#allocation2 + $0x250] sm:$0xff]
    %v884 = vld [vmem:[#allocation2 + $0x258] sm:$0xff]
    %v885 = vld [vmem:[#allocation2 + $0x260] sm:$0xff]
    %v886 = vld [vmem:[#allocation2 + $0x268] sm:$0xff]
    %v887 = vld [vmem:[#allocation2 + $0x270] sm:$0xff]
    %v888 = vld [vmem:[#allocation2 + $0x278] sm:$0xff]
    %v889 = vld [vmem:[%s1] sm:$0xff]
    %v890 = vld [vmem:[%s1 + $0x8] sm:$0xff]
    %v891 = vld [vmem:[%s1 + $0x10] sm:$0xff]
    %v892 = vld [vmem:[%s1 + $0x18] sm:$0xff]
    %v893 = vld [vmem:[%s1 + $0x20] sm:$0xff]
    %v894 = vld [vmem:[%s1 + $0x28] sm:$0xff]
    %v895 = vld [vmem:[%s1 + $0x30] sm:$0xff]
    %v896 = vld [vmem:[%s1 + $0x38] sm:$0xff]
    %v897 = vld [vmem:[%s1 + $0x40] sm:$0xff]
    %v898 = vld [vmem:[%s1 + $0x48] sm:$0xff]
    %v899 = vld [vmem:[%s1 + $0x50] sm:$0xff]
    %v900 = vld [vmem:[%s1 + $0x58] sm:$0xff]
    %v901 = vld [vmem:[%s1 + $0x60] sm:$0xff]
    %v902 = vld [vmem:[%s1 + $0x68] sm:$0xff]
    %v903 = vld [vmem:[%s1 + $0x70] sm:$0xff]
    %v904 = vld [vmem:[%s1 + $0x78] sm:$0xff]
    %v905 = vld [vmem:[%s1 + $0x80] sm:$0xff]
    %v906 = vld [vmem:[%s1 + $0x88] sm:$0xff]
    %v907 = vld [vmem:[%s1 + $0x90] sm:$0xff]
    %v908 = vld [vmem:[%s1 + $0x98] sm:$0xff]
    %v909 = vld [vmem:[%s1 + $0xa0] sm:$0xff]
    %v910 = vld [vmem:[%s1 + $0xa8] sm:$0xff]
    %v911 = vld [vmem:[%s1 + $0xb0] sm:$0xff]
    %v912 = vld [vmem:[%s1 + $0xb8] sm:$0xff]
    %v913 = vld [vmem:[%s1 + $0xc0] sm:$0xff]
    %v914 = vld [vmem:[%s1 + $0xc8] sm:$0xff]
    %v915 = vld [vmem:[%s1 + $0xd0] sm:$0xff]
    %v916 = vld [vmem:[%s1 + $0xd8] sm:$0xff]
    %v917 = vld [vmem:[%s1 + $0xe0] sm:$0xff]
    %v918 = vld [vmem:[%s1 + $0xe8] sm:$0xff]
    %v919 = vld [vmem:[%s1 + $0xf0] sm:$0xff]
    %v920 = vld [vmem:[%s1 + $0xf8] sm:$0xff]
    %v921 = vld [vmem:[%s1 + $0x100] sm:$0xff]
    %v922 = vld [vmem:[%s1 + $0x108] sm:$0xff]
    %v923 = vld [vmem:[%s1 + $0x110] sm:$0xff]
    %v924 = vld [vmem:[%s1 + $0x118] sm:$0xff]
    %v925 = vld [vmem:[%s1 + $0x120] sm:$0xff]
    %v926 = vld [vmem:[%s1 + $0x128] sm:$0xff]
    %v927 = vld [vmem:[%s1 + $0x130] sm:$0xff]
    %v928 = vld [vmem:[%s1 + $0x138] sm:$0xff]
    %v929 = vld [vmem:[%s1 + $0x140] sm:$0xff]
    %v930 = vld [vmem:[%s1 + $0x148] sm:$0xff]
    %v931 = vld [vmem:[%s1 + $0x150] sm:$0xff]
    %v932 = vld [vmem:[%s1 + $0x158] sm:$0xff]
    %v933 = vld [vmem:[%s1 + $0x160] sm:$0xff]
    %v934 = vld [vmem:[%s1 + $0x168] sm:$0xff]
    %v935 = vld [vmem:[%s1 + $0x170] sm:$0xff]
    %v936 = vld [vmem:[%s1 + $0x178] sm:$0xff]
    %v937 = vld [vmem:[%s1 + $0x180] sm:$0xff]
    %v938 = vld [vmem:[%s1 + $0x188] sm:$0xff]
    %v939 = vld [vmem:[%s1 + $0x190] sm:$0xff]
    %v940 = vld [vmem:[%s1 + $0x198] sm:$0xff]
    %v941 = vld [vmem:[%s1 + $0x1a0] sm:$0xff]
    %v942 = vld [vmem:[%s1 + $0x1a8] sm:$0xff]
    %v943 = vld [vmem:[%s1 + $0x1b0] sm:$0xff]
    %v944 = vld [vmem:[%s1 + $0x1b8] sm:$0xff]
    %v945 = vld [vmem:[%s1 + $0x1c0] sm:$0xff]
    %v946 = vld [vmem:[%s1 + $0x1c8] sm:$0xff]
    %v947 = vld [vmem:[%s1 + $0x1d0] sm:$0xff]
    %v948 = vld [vmem:[%s1 + $0x1d8] sm:$0xff]
    %v949 = vld [vmem:[%s1 + $0x1e0] sm:$0xff]
    %v950 = vld [vmem:[%s1 + $0x1e8] sm:$0xff]
    %v951 = vld [vmem:[%s1 + $0x1f0] sm:$0xff]
    %v952 = vld [vmem:[%s1 + $0x1f8] sm:$0xff]
    %v953 = vld [vmem:[%s1 + $0x200] sm:$0xff]
    %v954 = vld [vmem:[%s1 + $0x208] sm:$0xff]
    %v955 = vld [vmem:[%s1 + $0x210] sm:$0xff]
    %v956 = vld [vmem:[%s1 + $0x218] sm:$0xff]
    %v957 = vld [vmem:[%s1 + $0x220] sm:$0xff]
    %v958 = vld [vmem:[%s1 + $0x228] sm:$0xff]
    %v959 = vld [vmem:[%s1 + $0x230] sm:$0xff]
    %v960 = vld [vmem:[%s1 + $0x238] sm:$0xff]
    %v961 = vld [vmem:[%s2] sm:$0x1]
    %v963 = vperm.slane %v961, 0
    %v966 = vsel %vm472, %v813, 0
    %v969 = vsel %vm472, %v818, 0
    %v972 = vsel %vm472, %v823, 0
    %v975 = vsel %vm472, %v828, 0
    %v978 = vsel %vm472, %v833, 0
    %v981 = vsel %vm472, %v838, 0
    %v984 = vsel %vm472, %v843, 0
    %v987 = vsel %vm472, %v848, 0
    %v990 = vsel %vm472, %v853, 0
    %v993 = vsel %vm472, %v858, 0
    %v996 = vsel %vm472, %v863, 0
    %v999 = vsel %vm472, %v868, 0
    %v1002 = vsel %vm472, %v873, 0
    %v1005 = vsel %vm472, %v878, 0
    %v1008 = vsel %vm472, %v883, 0
    %v1011 = vsel %vm472, %v888, 0
    %1013 = vmatpush.msra.mxu0 %v904
    %1014 = vmatpush.msra.mxu0 %v903
    %1015 = vmatpush.msra.mxu0 %v902
    %1016 = vmatpush.msra.mxu0 %v901
    %1017 = vmatpush.msra.mxu0 %v900
    %1018 = vmatpush.msra.mxu0 %v899
    %1019 = vmatpush.msra.mxu0 %v898
    %1020 = vmatpush.msra.mxu0 %v897
    %1021 = vmatpush.msra.mxu0 %v896
    %1022 = vmatpush.msra.mxu0 %v895
    %1023 = vmatpush.msra.mxu0 %v894
    %1024 = vmatpush.msra.mxu0 %v893
    %1025 = vmatpush.msra.mxu0 %v892
    %1026 = vmatpush.msra.mxu0 %v891
    %1027 = vmatpush.msra.mxu0 %v890
    %1028 = vmatpush.msra.mxu0 %v889
    %1029 = vmatmul.f32.gmra.mxu0 %v809
    %v1030 = vpop.f32.mrf.mxu0
    %v1031 = vadd.f32 %v963, %v1030
    %1032 = vmatmul.f32.gmra.mxu0 %v814
    %v1033 = vpop.f32.mrf.mxu0
    %v1034 = vadd.f32 %v963, %v1033
    %1035 = vmatmul.f32.gmra.mxu0 %v819
    %v1036 = vpop.f32.mrf.mxu0
    %v1037 = vadd.f32 %v963, %v1036
    %1038 = vmatmul.f32.gmra.mxu0 %v824
    %v1039 = vpop.f32.mrf.mxu0
    %v1040 = vadd.f32 %v963, %v1039
    %1041 = vmatmul.f32.gmra.mxu0 %v829
    %v1042 = vpop.f32.mrf.mxu0
    %v1043 = vadd.f32 %v963, %v1042
    %1044 = vmatmul.f32.gmra.mxu0 %v834
    %v1045 = vpop.f32.mrf.mxu0
    %v1046 = vadd.f32 %v963, %v1045
    %1047 = vmatmul.f32.gmra.mxu0 %v839
    %v1048 = vpop.f32.mrf.mxu0
    %v1049 = vadd.f32 %v963, %v1048
    %1050 = vmatmul.f32.gmra.mxu0 %v844
    %v1051 = vpop.f32.mrf.mxu0
    %v1052 = vadd.f32 %v963, %v1051
    %1053 = vmatmul.f32.gmra.mxu0 %v849
    %v1054 = vpop.f32.mrf.mxu0
    %v1055 = vadd.f32 %v963, %v1054
    %1056 = vmatmul.f32.gmra.mxu0 %v854
    %v1057 = vpop.f32.mrf.mxu0
    %v1058 = vadd.f32 %v963, %v1057
    %1059 = vmatmul.f32.gmra.mxu0 %v859
    %v1060 = vpop.f32.mrf.mxu0
    %v1061 = vadd.f32 %v963, %v1060
    %1062 = vmatmul.f32.gmra.mxu0 %v864
    %v1063 = vpop.f32.mrf.mxu0
    %v1064 = vadd.f32 %v963, %v1063
    %1065 = vmatmul.f32.gmra.mxu0 %v869
    %v1066 = vpop.f32.mrf.mxu0
    %v1067 = vadd.f32 %v963, %v1066
    %1068 = vmatmul.f32.gmra.mxu0 %v874
    %v1069 = vpop.f32.mrf.mxu0
    %v1070 = vadd.f32 %v963, %v1069
    %1071 = vmatmul.f32.gmra.mxu0 %v879
    %v1072 = vpop.f32.mrf.mxu0
    %v1073 = vadd.f32 %v963, %v1072
    %1074 = vmatmul.f32.gmra.mxu0 %v884
    %v1075 = vpop.f32.mrf.mxu0
    %v1076 = vadd.f32 %v963, %v1075
    %1077 = vdwg.mxu0
    %1078 = vmatpush.msra.mxu0 %v920
    %1079 = vmatpush.msra.mxu0 %v919
    %1080 = vmatpush.msra.mxu0 %v918
    %1081 = vmatpush.msra.mxu0 %v917
    %1082 = vmatpush.msra.mxu0 %v916
    %1083 = vmatpush.msra.mxu0 %v915
    %1084 = vmatpush.msra.mxu0 %v914
    %1085 = vmatpush.msra.mxu0 %v913
    %1086 = vmatpush.msra.mxu0 %v912
    %1087 = vmatpush.msra.mxu0 %v911
    %1088 = vmatpush.msra.mxu0 %v910
    %1089 = vmatpush.msra.mxu0 %v909
    %1090 = vmatpush.msra.mxu0 %v908
    %1091 = vmatpush.msra.mxu0 %v907
    %1092 = vmatpush.msra.mxu0 %v906
    %1093 = vmatpush.msra.mxu0 %v905
    %1094 = vmatmul.f32.gmra.mxu0 %v810
    %v1095 = vpop.f32.mrf.mxu0
    %v1096 = vadd.f32 %v1031, %v1095
    %1097 = vmatmul.f32.gmra.mxu0 %v815
    %v1098 = vpop.f32.mrf.mxu0
    %v1099 = vadd.f32 %v1034, %v1098
    %1100 = vmatmul.f32.gmra.mxu0 %v820
    %v1101 = vpop.f32.mrf.mxu0
    %v1102 = vadd.f32 %v1037, %v1101
    %1103 = vmatmul.f32.gmra.mxu0 %v825
    %v1104 = vpop.f32.mrf.mxu0
    %v1105 = vadd.f32 %v1040, %v1104
    %1106 = vmatmul.f32.gmra.mxu0 %v830
    %v1107 = vpop.f32.mrf.mxu0
    %v1108 = vadd.f32 %v1043, %v1107
    %1109 = vmatmul.f32.gmra.mxu0 %v835
    %v1110 = vpop.f32.mrf.mxu0
    %v1111 = vadd.f32 %v1046, %v1110
    %1112 = vmatmul.f32.gmra.mxu0 %v840
    %v1113 = vpop.f32.mrf.mxu0
    %v1114 = vadd.f32 %v1049, %v1113
    %1115 = vmatmul.f32.gmra.mxu0 %v845
    %v1116 = vpop.f32.mrf.mxu0
    %v1117 = vadd.f32 %v1052, %v1116
    %1118 = vmatmul.f32.gmra.mxu0 %v850
    %v1119 = vpop.f32.mrf.mxu0
    %v1120 = vadd.f32 %v1055, %v1119
    %1121 = vmatmul.f32.gmra.mxu0 %v855
    %v1122 = vpop.f32.mrf.mxu0
    %v1123 = vadd.f32 %v1058, %v1122
    %1124 = vmatmul.f32.gmra.mxu0 %v860
    %v1125 = vpop.f32.mrf.mxu0
    %v1126 = vadd.f32 %v1061, %v1125
    %1127 = vmatmul.f32.gmra.mxu0 %v865
    %v1128 = vpop.f32.mrf.mxu0
    %v1129 = vadd.f32 %v1064, %v1128
    %1130 = vmatmul.f32.gmra.mxu0 %v870
    %v1131 = vpop.f32.mrf.mxu0
    %v1132 = vadd.f32 %v1067, %v1131
    %1133 = vmatmul.f32.gmra.mxu0 %v875
    %v1134 = vpop.f32.mrf.mxu0
    %v1135 = vadd.f32 %v1070, %v1134
    %1136 = vmatmul.f32.gmra.mxu0 %v880
    %v1137 = vpop.f32.mrf.mxu0
    %v1138 = vadd.f32 %v1073, %v1137
    %1139 = vmatmul.f32.gmra.mxu0 %v885
    %v1140 = vpop.f32.mrf.mxu0
    %v1141 = vadd.f32 %v1076, %v1140
    %1142 = vdwg.mxu0
    %1143 = vmatpush.msra.mxu0 %v936
    %1144 = vmatpush.msra.mxu0 %v935
    %1145 = vmatpush.msra.mxu0 %v934
    %1146 = vmatpush.msra.mxu0 %v933
    %1147 = vmatpush.msra.mxu0 %v932
    %1148 = vmatpush.msra.mxu0 %v931
    %1149 = vmatpush.msra.mxu0 %v930
    %1150 = vmatpush.msra.mxu0 %v929
    %1151 = vmatpush.msra.mxu0 %v928
    %1152 = vmatpush.msra.mxu0 %v927
    %1153 = vmatpush.msra.mxu0 %v926
    %1154 = vmatpush.msra.mxu0 %v925
    %1155 = vmatpush.msra.mxu0 %v924
    %1156 = vmatpush.msra.mxu0 %v923
    %1157 = vmatpush.msra.mxu0 %v922
    %1158 = vmatpush.msra.mxu0 %v921
    %1159 = vmatmul.f32.gmra.mxu0 %v811
    %v1160 = vpop.f32.mrf.mxu0
    %v1161 = vadd.f32 %v1096, %v1160
    %1162 = vmatmul.f32.gmra.mxu0 %v816
    %v1163 = vpop.f32.mrf.mxu0
    %v1164 = vadd.f32 %v1099, %v1163
    %1165 = vmatmul.f32.gmra.mxu0 %v821
    %v1166 = vpop.f32.mrf.mxu0
    %v1167 = vadd.f32 %v1102, %v1166
    %1168 = vmatmul.f32.gmra.mxu0 %v826
    %v1169 = vpop.f32.mrf.mxu0
    %v1170 = vadd.f32 %v1105, %v1169
    %1171 = vmatmul.f32.gmra.mxu0 %v831
    %v1172 = vpop.f32.mrf.mxu0
    %v1173 = vadd.f32 %v1108, %v1172
    %1174 = vmatmul.f32.gmra.mxu0 %v836
    %v1175 = vpop.f32.mrf.mxu0
    %v1176 = vadd.f32 %v1111, %v1175
    %1177 = vmatmul.f32.gmra.mxu0 %v841
    %v1178 = vpop.f32.mrf.mxu0
    %v1179 = vadd.f32 %v1114, %v1178
    %1180 = vmatmul.f32.gmra.mxu0 %v846
    %v1181 = vpop.f32.mrf.mxu0
    %v1182 = vadd.f32 %v1117, %v1181
    %1183 = vmatmul.f32.gmra.mxu0 %v851
    %v1184 = vpop.f32.mrf.mxu0
    %v1185 = vadd.f32 %v1120, %v1184
    %1186 = vmatmul.f32.gmra.mxu0 %v856
    %v1187 = vpop.f32.mrf.mxu0
    %v1188 = vadd.f32 %v1123, %v1187
    %1189 = vmatmul.f32.gmra.mxu0 %v861
    %v1190 = vpop.f32.mrf.mxu0
    %v1191 = vadd.f32 %v1126, %v1190
    %1192 = vmatmul.f32.gmra.mxu0 %v866
    %v1193 = vpop.f32.mrf.mxu0
    %v1194 = vadd.f32 %v1129, %v1193
    %1195 = vmatmul.f32.gmra.mxu0 %v871
    %v1196 = vpop.f32.mrf.mxu0
    %v1197 = vadd.f32 %v1132, %v1196
    %1198 = vmatmul.f32.gmra.mxu0 %v876
    %v1199 = vpop.f32.mrf.mxu0
    %v1200 = vadd.f32 %v1135, %v1199
    %1201 = vmatmul.f32.gmra.mxu0 %v881
    %v1202 = vpop.f32.mrf.mxu0
    %v1203 = vadd.f32 %v1138, %v1202
    %1204 = vmatmul.f32.gmra.mxu0 %v886
    %v1205 = vpop.f32.mrf.mxu0
    %v1206 = vadd.f32 %v1141, %v1205
    %1207 = vdwg.mxu0
    %1208 = vmatpush.msra.mxu0 %v952
    %1209 = vmatpush.msra.mxu0 %v951
    %1210 = vmatpush.msra.mxu0 %v950
    %1211 = vmatpush.msra.mxu0 %v949
    %1212 = vmatpush.msra.mxu0 %v948
    %1213 = vmatpush.msra.mxu0 %v947
    %1214 = vmatpush.msra.mxu0 %v946
    %1215 = vmatpush.msra.mxu0 %v945
    %1216 = vmatpush.msra.mxu0 %v944
    %1217 = vmatpush.msra.mxu0 %v943
    %1218 = vmatpush.msra.mxu0 %v942
    %1219 = vmatpush.msra.mxu0 %v941
    %1220 = vmatpush.msra.mxu0 %v940
    %1221 = vmatpush.msra.mxu0 %v939
    %1222 = vmatpush.msra.mxu0 %v938
    %1223 = vmatpush.msra.mxu0 %v937
    %1224 = vmatmul.f32.gmra.mxu0 %v812
    %v1225 = vpop.f32.mrf.mxu0
    %v1226 = vadd.f32 %v1161, %v1225
    %1227 = vmatmul.f32.gmra.mxu0 %v817
    %v1228 = vpop.f32.mrf.mxu0
    %v1229 = vadd.f32 %v1164, %v1228
    %1230 = vmatmul.f32.gmra.mxu0 %v822
    %v1231 = vpop.f32.mrf.mxu0
    %v1232 = vadd.f32 %v1167, %v1231
    %1233 = vmatmul.f32.gmra.mxu0 %v827
    %v1234 = vpop.f32.mrf.mxu0
    %v1235 = vadd.f32 %v1170, %v1234
    %1236 = vmatmul.f32.gmra.mxu0 %v832
    %v1237 = vpop.f32.mrf.mxu0
    %v1238 = vadd.f32 %v1173, %v1237
    %1239 = vmatmul.f32.gmra.mxu0 %v837
    %v1240 = vpop.f32.mrf.mxu0
    %v1241 = vadd.f32 %v1176, %v1240
    %1242 = vmatmul.f32.gmra.mxu0 %v842
    %v1243 = vpop.f32.mrf.mxu0
    %v1244 = vadd.f32 %v1179, %v1243
    %1245 = vmatmul.f32.gmra.mxu0 %v847
    %v1246 = vpop.f32.mrf.mxu0
    %v1247 = vadd.f32 %v1182, %v1246
    %1248 = vmatmul.f32.gmra.mxu0 %v852
    %v1249 = vpop.f32.mrf.mxu0
    %v1250 = vadd.f32 %v1185, %v1249
    %1251 = vmatmul.f32.gmra.mxu0 %v857
    %v1252 = vpop.f32.mrf.mxu0
    %v1253 = vadd.f32 %v1188, %v1252
    %1254 = vmatmul.f32.gmra.mxu0 %v862
    %v1255 = vpop.f32.mrf.mxu0
    %v1256 = vadd.f32 %v1191, %v1255
    %1257 = vmatmul.f32.gmra.mxu0 %v867
    %v1258 = vpop.f32.mrf.mxu0
    %v1259 = vadd.f32 %v1194, %v1258
    %1260 = vmatmul.f32.gmra.mxu0 %v872
    %v1261 = vpop.f32.mrf.mxu0
    %v1262 = vadd.f32 %v1197, %v1261
    %1263 = vmatmul.f32.gmra.mxu0 %v877
    %v1264 = vpop.f32.mrf.mxu0
    %v1265 = vadd.f32 %v1200, %v1264
    %1266 = vmatmul.f32.gmra.mxu0 %v882
    %v1267 = vpop.f32.mrf.mxu0
    %v1268 = vadd.f32 %v1203, %v1267
    %1269 = vmatmul.f32.gmra.mxu0 %v887
    %v1270 = vpop.f32.mrf.mxu0
    %v1271 = vadd.f32 %v1206, %v1270
    %1272 = vdwg.mxu0
    %1273 = vmatpush.msra.mxu0 0.0
    %1274 = vmatpush.msra.mxu0 0.0
    %1275 = vmatpush.msra.mxu0 0.0
    %1276 = vmatpush.msra.mxu0 0.0
    %1277 = vmatpush.msra.mxu0 0.0
    %1278 = vmatpush.msra.mxu0 0.0
    %1279 = vmatpush.msra.mxu0 0.0
    %1280 = vmatpush.msra.mxu0 0.0
    %1281 = vmatpush.msra.mxu0 %v960
    %1282 = vmatpush.msra.mxu0 %v959
    %1283 = vmatpush.msra.mxu0 %v958
    %1284 = vmatpush.msra.mxu0 %v957
    %1285 = vmatpush.msra.mxu0 %v956
    %1286 = vmatpush.msra.mxu0 %v955
    %1287 = vmatpush.msra.mxu0 %v954
    %1288 = vmatpush.msra.mxu0 %v953
    %1289 = vmatmul.f32.gmra.mxu0 %v966
    %v1290 = vpop.f32.mrf.mxu0
    %v1291 = vadd.f32 %v1226, %v1290
    %1292 = vmatmul.f32.gmra.mxu0 %v969
    %v1293 = vpop.f32.mrf.mxu0
    %v1294 = vadd.f32 %v1229, %v1293
    %1295 = vmatmul.f32.gmra.mxu0 %v972
    %v1296 = vpop.f32.mrf.mxu0
    %v1297 = vadd.f32 %v1232, %v1296
    %1298 = vmatmul.f32.gmra.mxu0 %v975
    %v1299 = vpop.f32.mrf.mxu0
    %v1300 = vadd.f32 %v1235, %v1299
    %1301 = vmatmul.f32.gmra.mxu0 %v978
    %v1302 = vpop.f32.mrf.mxu0
    %v1303 = vadd.f32 %v1238, %v1302
    %1304 = vmatmul.f32.gmra.mxu0 %v981
    %v1305 = vpop.f32.mrf.mxu0
    %v1306 = vadd.f32 %v1241, %v1305
    %1307 = vmatmul.f32.gmra.mxu0 %v984
    %v1308 = vpop.f32.mrf.mxu0
    %v1309 = vadd.f32 %v1244, %v1308
    %1310 = vmatmul.f32.gmra.mxu0 %v987
    %v1311 = vpop.f32.mrf.mxu0
    %v1312 = vadd.f32 %v1247, %v1311
    %1313 = vmatmul.f32.gmra.mxu0 %v990
    %v1314 = vpop.f32.mrf.mxu0
    %v1315 = vadd.f32 %v1250, %v1314
    %1316 = vmatmul.f32.gmra.mxu0 %v993
    %v1317 = vpop.f32.mrf.mxu0
    %v1318 = vadd.f32 %v1253, %v1317
    %1319 = vmatmul.f32.gmra.mxu0 %v996
    %v1320 = vpop.f32.mrf.mxu0
    %v1321 = vadd.f32 %v1256, %v1320
    %1322 = vmatmul.f32.gmra.mxu0 %v999
    %v1323 = vpop.f32.mrf.mxu0
    %v1324 = vadd.f32 %v1259, %v1323
    %1325 = vmatmul.f32.gmra.mxu0 %v1002
    %v1326 = vpop.f32.mrf.mxu0
    %v1327 = vadd.f32 %v1262, %v1326
    %1328 = vmatmul.f32.gmra.mxu0 %v1005
    %v1329 = vpop.f32.mrf.mxu0
    %v1330 = vadd.f32 %v1265, %v1329
    %1331 = vmatmul.f32.gmra.mxu0 %v1008
    %v1332 = vpop.f32.mrf.mxu0
    %v1333 = vadd.f32 %v1268, %v1332
    %1334 = vmatmul.f32.gmra.mxu0 %v1011
    %v1335 = vpop.f32.mrf.mxu0
    %v1336 = vadd.f32 %v1271, %v1335
    %1337 = vdwg.mxu0
    %v1338 = vmax.f32 %v1291, 0.0
    %v1339 = vmax.f32 %v1294, 0.0
    %v1340 = vmax.f32 %v1297, 0.0
    %v1341 = vmax.f32 %v1300, 0.0
    %v1342 = vmax.f32 %v1303, 0.0
    %v1343 = vmax.f32 %v1306, 0.0
    %v1344 = vmax.f32 %v1309, 0.0
    %v1345 = vmax.f32 %v1312, 0.0
    %v1346 = vmax.f32 %v1315, 0.0
    %v1347 = vmax.f32 %v1318, 0.0
    %v1348 = vmax.f32 %v1321, 0.0
    %v1349 = vmax.f32 %v1324, 0.0
    %v1350 = vmax.f32 %v1327, 0.0
    %v1351 = vmax.f32 %v1330, 0.0
    %v1352 = vmax.f32 %v1333, 0.0
    %v1353 = vmax.f32 %v1336, 0.0
    %v1354 = vrot.slane %v1338, 7
    %v1355 = vrot.slane %v1339, 7
    %v1356 = vrot.slane %v1340, 7
    %v1357 = vrot.slane %v1341, 7
    %v1358 = vrot.slane %v1342, 7
    %v1359 = vrot.slane %v1343, 7
    %v1360 = vrot.slane %v1344, 7
    %v1361 = vrot.slane %v1345, 7
    %v1362 = vrot.slane %v1346, 7
    %v1363 = vrot.slane %v1347, 7
    %v1364 = vrot.slane %v1348, 7
    %v1365 = vrot.slane %v1349, 7
    %v1366 = vrot.slane %v1350, 7
    %v1367 = vrot.slane %v1351, 7
    %v1368 = vrot.slane %v1352, 7
    %v1369 = vrot.slane %v1353, 7
    %v1370 = vsel %vm166, %v1368, %v1369
    %v1371 = vsel %vm166, %v1367, %v1368
    %v1372 = vsel %vm166, %v1366, %v1367
    %v1373 = vsel %vm166, %v1365, %v1366
    %v1374 = vsel %vm166, %v1364, %v1365
    %v1375 = vsel %vm166, %v1363, %v1364
    %v1376 = vsel %vm166, %v1362, %v1363
    %v1377 = vsel %vm166, %v1361, %v1362
    %v1378 = vsel %vm166, %v1360, %v1361
    %v1379 = vsel %vm166, %v1359, %v1360
    %v1380 = vsel %vm166, %v1358, %v1359
    %v1381 = vsel %vm166, %v1357, %v1358
    %v1382 = vsel %vm166, %v1356, %v1357
    %v1383 = vsel %vm166, %v1355, %v1356
    %v1384 = vsel %vm166, %v1354, %v1355
    %v1385 = vsel %vm166, %v1369, %v1354
    %v1386 = vsel %vm183, %v1370, 0.0
    %v1387 = vsel %vm184, %v1385, 0.0
    %v1388 = vsel %vm185, %v1384, 0.0
    %v1389 = vsel %vm186, %v1383, 0.0
    %v1390 = vsel %vm187, %v1382, 0.0
    %v1391 = vsel %vm188, %v1381, 0.0
    %v1392 = vsel %vm189, %v1380, 0.0
    %v1393 = vsel %vm190, %v1379, 0.0
    %v1394 = vsel %vm191, %v1378, 0.0
    %v1395 = vsel %vm192, %v1377, 0.0
    %v1396 = vsel %vm193, %v1376, 0.0
    %v1397 = vsel %vm194, %v1375, 0.0
    %v1398 = vsel %vm195, %v1374, 0.0
    %v1399 = vsel %vm196, %v1373, 0.0
    %v1400 = vsel %vm197, %v1372, 0.0
    %v1401 = vsel %vm198, %v1371, 0.0
    %v1402 = vsel %vm102, %v1353, 0.0
    %v1403 = vsel %vm103, %v1338, 0.0
    %v1404 = vsel %vm104, %v1339, 0.0
    %v1405 = vsel %vm105, %v1340, 0.0
    %v1406 = vsel %vm106, %v1341, 0.0
    %v1407 = vsel %vm107, %v1342, 0.0
    %v1408 = vsel %vm108, %v1343, 0.0
    %v1409 = vsel %vm109, %v1344, 0.0
    %v1410 = vsel %vm110, %v1345, 0.0
    %v1411 = vsel %vm111, %v1346, 0.0
    %v1412 = vsel %vm112, %v1347, 0.0
    %v1413 = vsel %vm113, %v1348, 0.0
    %v1414 = vsel %vm114, %v1349, 0.0
    %v1415 = vsel %vm115, %v1350, 0.0
    %v1416 = vsel %vm116, %v1351, 0.0
    %v1417 = vsel %vm117, %v1352, 0.0
    %v1418 = vrot.slane %v1338, 1
    %v1419 = vrot.slane %v1339, 1
    %v1420 = vrot.slane %v1340, 1
    %v1421 = vrot.slane %v1341, 1
    %v1422 = vrot.slane %v1342, 1
    %v1423 = vrot.slane %v1343, 1
    %v1424 = vrot.slane %v1344, 1
    %v1425 = vrot.slane %v1345, 1
    %v1426 = vrot.slane %v1346, 1
    %v1427 = vrot.slane %v1347, 1
    %v1428 = vrot.slane %v1348, 1
    %v1429 = vrot.slane %v1349, 1
    %v1430 = vrot.slane %v1350, 1
    %v1431 = vrot.slane %v1351, 1
    %v1432 = vrot.slane %v1352, 1
    %v1433 = vrot.slane %v1353, 1
    %v1434 = vsel %vm247, %v1432, %v1433
    %v1435 = vsel %vm247, %v1431, %v1432
    %v1436 = vsel %vm247, %v1430, %v1431
    %v1437 = vsel %vm247, %v1429, %v1430
    %v1438 = vsel %vm247, %v1428, %v1429
    %v1439 = vsel %vm247, %v1427, %v1428
    %v1440 = vsel %vm247, %v1426, %v1427
    %v1441 = vsel %vm247, %v1425, %v1426
    %v1442 = vsel %vm247, %v1424, %v1425
    %v1443 = vsel %vm247, %v1423, %v1424
    %v1444 = vsel %vm247, %v1422, %v1423
    %v1445 = vsel %vm247, %v1421, %v1422
    %v1446 = vsel %vm247, %v1420, %v1421
    %v1447 = vsel %vm247, %v1419, %v1420
    %v1448 = vsel %vm247, %v1418, %v1419
    %v1449 = vsel %vm247, %v1433, %v1418
    %v1450 = vsel %vm264, %v1449, 0.0
    %v1451 = vsel %vm265, %v1448, 0.0
    %v1452 = vsel %vm266, %v1447, 0.0
    %v1453 = vsel %vm267, %v1446, 0.0
    %v1454 = vsel %vm268, %v1445, 0.0
    %v1455 = vsel %vm269, %v1444, 0.0
    %v1456 = vsel %vm270, %v1443, 0.0
    %v1457 = vsel %vm271, %v1442, 0.0
    %v1458 = vsel %vm272, %v1441, 0.0
    %v1459 = vsel %vm273, %v1440, 0.0
    %v1460 = vsel %vm274, %v1439, 0.0
    %v1461 = vsel %vm275, %v1438, 0.0
    %v1462 = vsel %vm276, %v1437, 0.0
    %v1463 = vsel %vm277, %v1436, 0.0
    %v1464 = vsel %vm278, %v1435, 0.0
    %v1465 = vsel %vm279, %v1434, 0.0
    %v1466 = vsel %vm70, %v1385, 0.0
    %v1467 = vsel %vm71, %v1384, 0.0
    %v1468 = vsel %vm72, %v1383, 0.0
    %v1469 = vsel %vm73, %v1382, 0.0
    %v1470 = vsel %vm74, %v1381, 0.0
    %v1471 = vsel %vm75, %v1380, 0.0
    %v1472 = vsel %vm76, %v1379, 0.0
    %v1473 = vsel %vm77, %v1378, 0.0
    %v1474 = vsel %vm78, %v1377, 0.0
    %v1475 = vsel %vm79, %v1376, 0.0
    %v1476 = vsel %vm80, %v1375, 0.0
    %v1477 = vsel %vm81, %v1374, 0.0
    %v1478 = vsel %vm82, %v1373, 0.0
    %v1479 = vsel %vm83, %v1372, 0.0
    %v1480 = vsel %vm84, %v1371, 0.0
    %v1481 = vsel %vm85, %v1370, 0.0
    %v1482 = vsel %vm86, %v1448, 0.0
    %v1483 = vsel %vm87, %v1447, 0.0
    %v1484 = vsel %vm88, %v1446, 0.0
    %v1485 = vsel %vm89, %v1445, 0.0
    %v1486 = vsel %vm90, %v1444, 0.0
    %v1487 = vsel %vm91, %v1443, 0.0
    %v1488 = vsel %vm92, %v1442, 0.0
    %v1489 = vsel %vm93, %v1441, 0.0
    %v1490 = vsel %vm94, %v1440, 0.0
    %v1491 = vsel %vm95, %v1439, 0.0
    %v1492 = vsel %vm96, %v1438, 0.0
    %v1493 = vsel %vm97, %v1437, 0.0
    %v1494 = vsel %vm98, %v1436, 0.0
    %v1495 = vsel %vm99, %v1435, 0.0
    %v1496 = vsel %vm100, %v1434, 0.0
    %v1497 = vsel %vm101, %v1449, 0.0
    %v1498 = vsel %vm328, %v1384, 0.0
    %v1499 = vsel %vm329, %v1383, 0.0
    %v1500 = vsel %vm330, %v1382, 0.0
    %v1501 = vsel %vm331, %v1381, 0.0
    %v1502 = vsel %vm332, %v1380, 0.0
    %v1503 = vsel %vm333, %v1379, 0.0
    %v1504 = vsel %vm334, %v1378, 0.0
    %v1505 = vsel %vm335, %v1377, 0.0
    %v1506 = vsel %vm336, %v1376, 0.0
    %v1507 = vsel %vm337, %v1375, 0.0
    %v1508 = vsel %vm338, %v1374, 0.0
    %v1509 = vsel %vm339, %v1373, 0.0
    %v1510 = vsel %vm340, %v1372, 0.0
    %v1511 = vsel %vm341, %v1371, 0.0
    %v1512 = vsel %vm342, %v1370, 0.0
    %v1513 = vsel %vm343, %v1385, 0.0
    %v1514 = vsel %vm118, %v1339, 0.0
    %v1515 = vsel %vm119, %v1340, 0.0
    %v1516 = vsel %vm120, %v1341, 0.0
    %v1517 = vsel %vm121, %v1342, 0.0
    %v1518 = vsel %vm122, %v1343, 0.0
    %v1519 = vsel %vm123, %v1344, 0.0
    %v1520 = vsel %vm124, %v1345, 0.0
    %v1521 = vsel %vm125, %v1346, 0.0
    %v1522 = vsel %vm126, %v1347, 0.0
    %v1523 = vsel %vm127, %v1348, 0.0
    %v1524 = vsel %vm128, %v1349, 0.0
    %v1525 = vsel %vm129, %v1350, 0.0
    %v1526 = vsel %vm130, %v1351, 0.0
    %v1527 = vsel %vm131, %v1352, 0.0
    %v1528 = vsel %vm132, %v1353, 0.0
    %v1529 = vsel %vm133, %v1338, 0.0
    %v1530 = vsel %vm376, %v1447, 0.0
    %v1531 = vsel %vm377, %v1446, 0.0
    %v1532 = vsel %vm378, %v1445, 0.0
    %v1533 = vsel %vm379, %v1444, 0.0
    %v1534 = vsel %vm380, %v1443, 0.0
    %v1535 = vsel %vm381, %v1442, 0.0
    %v1536 = vsel %vm382, %v1441, 0.0
    %v1537 = vsel %vm383, %v1440, 0.0
    %v1538 = vsel %vm384, %v1439, 0.0
    %v1539 = vsel %vm385, %v1438, 0.0
    %v1540 = vsel %vm386, %v1437, 0.0
    %v1541 = vsel %vm387, %v1436, 0.0
    %v1542 = vsel %vm388, %v1435, 0.0
    %v1543 = vsel %vm389, %v1434, 0.0
    %v1544 = vsel %vm390, %v1449, 0.0
    %v1545 = vsel %vm391, %v1448, 0.0
    %1562 = vrot.lane.b32.xlu0 %v1402, 64
    %v1563 = vpop.permute.xlu0 %1562
    %1564 = vrot.lane.b32.xlu0 %v1403, 64
    %v1565 = vpop.permute.xlu0 %1564
    %1566 = vrot.lane.b32.xlu0 %v1404, 64
    %v1567 = vpop.permute.xlu0 %1566
    %1568 = vrot.lane.b32.xlu0 %v1405, 64
    %v1569 = vpop.permute.xlu0 %1568
    %1570 = vrot.lane.b32.xlu0 %v1406, 64
    %v1571 = vpop.permute.xlu0 %1570
    %1572 = vrot.lane.b32.xlu0 %v1407, 64
    %v1573 = vpop.permute.xlu0 %1572
    %1574 = vrot.lane.b32.xlu0 %v1408, 64
    %v1575 = vpop.permute.xlu0 %1574
    %1576 = vrot.lane.b32.xlu0 %v1409, 64
    %v1577 = vpop.permute.xlu0 %1576
    %1578 = vrot.lane.b32.xlu0 %v1410, 64
    %v1579 = vpop.permute.xlu0 %1578
    %1580 = vrot.lane.b32.xlu0 %v1411, 64
    %v1581 = vpop.permute.xlu0 %1580
    %1582 = vrot.lane.b32.xlu0 %v1412, 64
    %v1583 = vpop.permute.xlu0 %1582
    %1584 = vrot.lane.b32.xlu0 %v1413, 64
    %v1585 = vpop.permute.xlu0 %1584
    %1586 = vrot.lane.b32.xlu0 %v1414, 64
    %v1587 = vpop.permute.xlu0 %1586
    %1588 = vrot.lane.b32.xlu0 %v1415, 64
    %v1589 = vpop.permute.xlu0 %1588
    %1590 = vrot.lane.b32.xlu0 %v1416, 64
    %v1591 = vpop.permute.xlu0 %1590
    %1592 = vrot.lane.b32.xlu0 %v1417, 64
    %v1593 = vpop.permute.xlu0 %1592
    %v1610 = vsel %vm472, %v1386, %v1563
    %v1611 = vsel %vm472, %v1387, %v1565
    %v1612 = vsel %vm472, %v1388, %v1567
    %v1613 = vsel %vm472, %v1389, %v1569
    %v1614 = vsel %vm472, %v1390, %v1571
    %v1615 = vsel %vm472, %v1391, %v1573
    %v1616 = vsel %vm472, %v1392, %v1575
    %v1617 = vsel %vm472, %v1393, %v1577
    %v1618 = vsel %vm472, %v1394, %v1579
    %v1619 = vsel %vm472, %v1395, %v1581
    %v1620 = vsel %vm472, %v1396, %v1583
    %v1621 = vsel %vm472, %v1397, %v1585
    %v1622 = vsel %vm472, %v1398, %v1587
    %v1623 = vsel %vm472, %v1399, %v1589
    %v1624 = vsel %vm472, %v1400, %v1591
    %v1625 = vsel %vm472, %v1401, %v1593
    %1626 = vst [vmem:[#allocation2] sm:$0xff] %v1610
    %1627 = vst [vmem:[#allocation2 + $0x28] sm:$0xff] %v1611
    %1628 = vst [vmem:[#allocation2 + $0x50] sm:$0xff] %v1612
    %1629 = vst [vmem:[#allocation2 + $0x78] sm:$0xff] %v1613
    %1630 = vst [vmem:[#allocation2 + $0xa0] sm:$0xff] %v1614
    %1631 = vst [vmem:[#allocation2 + $0xc8] sm:$0xff] %v1615
    %1632 = vst [vmem:[#allocation2 + $0xf0] sm:$0xff] %v1616
    %1633 = vst [vmem:[#allocation2 + $0x118] sm:$0xff] %v1617
    %1634 = vst [vmem:[#allocation2 + $0x140] sm:$0xff] %v1618
    %1635 = vst [vmem:[#allocation2 + $0x168] sm:$0xff] %v1619
    %1636 = vst [vmem:[#allocation2 + $0x190] sm:$0xff] %v1620
    %1637 = vst [vmem:[#allocation2 + $0x1b8] sm:$0xff] %v1621
    %1638 = vst [vmem:[#allocation2 + $0x1e0] sm:$0xff] %v1622
    %1639 = vst [vmem:[#allocation2 + $0x208] sm:$0xff] %v1623
    %1640 = vst [vmem:[#allocation2 + $0x230] sm:$0xff] %v1624
    %1641 = vst [vmem:[#allocation2 + $0x258] sm:$0xff] %v1625
    %1658 = vrot.lane.b32.xlu0 %v1466, 64
    %v1659 = vpop.permute.xlu0 %1658
    %1660 = vrot.lane.b32.xlu0 %v1467, 64
    %v1661 = vpop.permute.xlu0 %1660
    %1662 = vrot.lane.b32.xlu0 %v1468, 64
    %v1663 = vpop.permute.xlu0 %1662
    %1664 = vrot.lane.b32.xlu0 %v1469, 64
    %v1665 = vpop.permute.xlu0 %1664
    %1666 = vrot.lane.b32.xlu0 %v1470, 64
    %v1667 = vpop.permute.xlu0 %1666
    %1668 = vrot.lane.b32.xlu0 %v1471, 64
    %v1669 = vpop.permute.xlu0 %1668
    %1670 = vrot.lane.b32.xlu0 %v1472, 64
    %v1671 = vpop.permute.xlu0 %1670
    %1672 = vrot.lane.b32.xlu0 %v1473, 64
    %v1673 = vpop.permute.xlu0 %1672
    %1674 = vrot.lane.b32.xlu0 %v1474, 64
    %v1675 = vpop.permute.xlu0 %1674
    %1676 = vrot.lane.b32.xlu0 %v1475, 64
    %v1677 = vpop.permute.xlu0 %1676
    %1678 = vrot.lane.b32.xlu0 %v1476, 64
    %v1679 = vpop.permute.xlu0 %1678
    %1680 = vrot.lane.b32.xlu0 %v1477, 64
    %v1681 = vpop.permute.xlu0 %1680
    %1682 = vrot.lane.b32.xlu0 %v1478, 64
    %v1683 = vpop.permute.xlu0 %1682
    %1684 = vrot.lane.b32.xlu0 %v1479, 64
    %v1685 = vpop.permute.xlu0 %1684
    %1686 = vrot.lane.b32.xlu0 %v1480, 64
    %v1687 = vpop.permute.xlu0 %1686
    %1688 = vrot.lane.b32.xlu0 %v1481, 64
    %v1689 = vpop.permute.xlu0 %1688
    %v1706 = vsel %vm472, %v1450, %v1659
    %v1707 = vsel %vm472, %v1451, %v1661
    %v1708 = vsel %vm472, %v1452, %v1663
    %v1709 = vsel %vm472, %v1453, %v1665
    %v1710 = vsel %vm472, %v1454, %v1667
    %v1711 = vsel %vm472, %v1455, %v1669
    %v1712 = vsel %vm472, %v1456, %v1671
    %v1713 = vsel %vm472, %v1457, %v1673
    %v1714 = vsel %vm472, %v1458, %v1675
    %v1715 = vsel %vm472, %v1459, %v1677
    %v1716 = vsel %vm472, %v1460, %v1679
    %v1717 = vsel %vm472, %v1461, %v1681
    %v1718 = vsel %vm472, %v1462, %v1683
    %v1719 = vsel %vm472, %v1463, %v1685
    %v1720 = vsel %vm472, %v1464, %v1687
    %v1721 = vsel %vm472, %v1465, %v1689
    %1722 = vst [vmem:[#allocation2 + $0x8] sm:$0xff] %v1706
    %1723 = vst [vmem:[#allocation2 + $0x30] sm:$0xff] %v1707
    %1724 = vst [vmem:[#allocation2 + $0x58] sm:$0xff] %v1708
    %1725 = vst [vmem:[#allocation2 + $0x80] sm:$0xff] %v1709
    %1726 = vst [vmem:[#allocation2 + $0xa8] sm:$0xff] %v1710
    %1727 = vst [vmem:[#allocation2 + $0xd0] sm:$0xff] %v1711
    %1728 = vst [vmem:[#allocation2 + $0xf8] sm:$0xff] %v1712
    %1729 = vst [vmem:[#allocation2 + $0x120] sm:$0xff] %v1713
    %1730 = vst [vmem:[#allocation2 + $0x148] sm:$0xff] %v1714
    %1731 = vst [vmem:[#allocation2 + $0x170] sm:$0xff] %v1715
    %1732 = vst [vmem:[#allocation2 + $0x198] sm:$0xff] %v1716
    %1733 = vst [vmem:[#allocation2 + $0x1c0] sm:$0xff] %v1717
    %1734 = vst [vmem:[#allocation2 + $0x1e8] sm:$0xff] %v1718
    %1735 = vst [vmem:[#allocation2 + $0x210] sm:$0xff] %v1719
    %1736 = vst [vmem:[#allocation2 + $0x238] sm:$0xff] %v1720
    %1737 = vst [vmem:[#allocation2 + $0x260] sm:$0xff] %v1721
    %1754 = vrot.lane.b32.xlu0 %v1482, 64
    %v1755 = vpop.permute.xlu0 %1754
    %1756 = vrot.lane.b32.xlu0 %v1483, 64
    %v1757 = vpop.permute.xlu0 %1756
    %1758 = vrot.lane.b32.xlu0 %v1484, 64
    %v1759 = vpop.permute.xlu0 %1758
    %1760 = vrot.lane.b32.xlu0 %v1485, 64
    %v1761 = vpop.permute.xlu0 %1760
    %1762 = vrot.lane.b32.xlu0 %v1486, 64
    %v1763 = vpop.permute.xlu0 %1762
    %1764 = vrot.lane.b32.xlu0 %v1487, 64
    %v1765 = vpop.permute.xlu0 %1764
    %1766 = vrot.lane.b32.xlu0 %v1488, 64
    %v1767 = vpop.permute.xlu0 %1766
    %1768 = vrot.lane.b32.xlu0 %v1489, 64
    %v1769 = vpop.permute.xlu0 %1768
    %1770 = vrot.lane.b32.xlu0 %v1490, 64
    %v1771 = vpop.permute.xlu0 %1770
    %1772 = vrot.lane.b32.xlu0 %v1491, 64
    %v1773 = vpop.permute.xlu0 %1772
    %1774 = vrot.lane.b32.xlu0 %v1492, 64
    %v1775 = vpop.permute.xlu0 %1774
    %1776 = vrot.lane.b32.xlu0 %v1493, 64
    %v1777 = vpop.permute.xlu0 %1776
    %1778 = vrot.lane.b32.xlu0 %v1494, 64
    %v1779 = vpop.permute.xlu0 %1778
    %1780 = vrot.lane.b32.xlu0 %v1495, 64
    %v1781 = vpop.permute.xlu0 %1780
    %1782 = vrot.lane.b32.xlu0 %v1496, 64
    %v1783 = vpop.permute.xlu0 %1782
    %1784 = vrot.lane.b32.xlu0 %v1497, 64
    %v1785 = vpop.permute.xlu0 %1784
    %v1802 = vsel %vm472, %v1338, %v1755
    %v1803 = vsel %vm472, %v1339, %v1757
    %v1804 = vsel %vm472, %v1340, %v1759
    %v1805 = vsel %vm472, %v1341, %v1761
    %v1806 = vsel %vm472, %v1342, %v1763
    %v1807 = vsel %vm472, %v1343, %v1765
    %v1808 = vsel %vm472, %v1344, %v1767
    %v1809 = vsel %vm472, %v1345, %v1769
    %v1810 = vsel %vm472, %v1346, %v1771
    %v1811 = vsel %vm472, %v1347, %v1773
    %v1812 = vsel %vm472, %v1348, %v1775
    %v1813 = vsel %vm472, %v1349, %v1777
    %v1814 = vsel %vm472, %v1350, %v1779
    %v1815 = vsel %vm472, %v1351, %v1781
    %v1816 = vsel %vm472, %v1352, %v1783
    %v1817 = vsel %vm472, %v1353, %v1785
    %1818 = vst [vmem:[#allocation2 + $0x10] sm:$0xff] %v1802
    %1819 = vst [vmem:[#allocation2 + $0x38] sm:$0xff] %v1803
    %1820 = vst [vmem:[#allocation2 + $0x60] sm:$0xff] %v1804
    %1821 = vst [vmem:[#allocation2 + $0x88] sm:$0xff] %v1805
    %1822 = vst [vmem:[#allocation2 + $0xb0] sm:$0xff] %v1806
    %1823 = vst [vmem:[#allocation2 + $0xd8] sm:$0xff] %v1807
    %1824 = vst [vmem:[#allocation2 + $0x100] sm:$0xff] %v1808
    %1825 = vst [vmem:[#allocation2 + $0x128] sm:$0xff] %v1809
    %1826 = vst [vmem:[#allocation2 + $0x150] sm:$0xff] %v1810
    %1827 = vst [vmem:[#allocation2 + $0x178] sm:$0xff] %v1811
    %1828 = vst [vmem:[#allocation2 + $0x1a0] sm:$0xff] %v1812
    %1829 = vst [vmem:[#allocation2 + $0x1c8] sm:$0xff] %v1813
    %1830 = vst [vmem:[#allocation2 + $0x1f0] sm:$0xff] %v1814
    %1831 = vst [vmem:[#allocation2 + $0x218] sm:$0xff] %v1815
    %1832 = vst [vmem:[#allocation2 + $0x240] sm:$0xff] %v1816
    %1833 = vst [vmem:[#allocation2 + $0x268] sm:$0xff] %v1817
    %1850 = vrot.lane.b32.xlu0 %v1514, 64
    %v1851 = vpop.permute.xlu0 %1850
    %1852 = vrot.lane.b32.xlu0 %v1515, 64
    %v1853 = vpop.permute.xlu0 %1852
    %1854 = vrot.lane.b32.xlu0 %v1516, 64
    %v1855 = vpop.permute.xlu0 %1854
    %1856 = vrot.lane.b32.xlu0 %v1517, 64
    %v1857 = vpop.permute.xlu0 %1856
    %1858 = vrot.lane.b32.xlu0 %v1518, 64
    %v1859 = vpop.permute.xlu0 %1858
    %1860 = vrot.lane.b32.xlu0 %v1519, 64
    %v1861 = vpop.permute.xlu0 %1860
    %1862 = vrot.lane.b32.xlu0 %v1520, 64
    %v1863 = vpop.permute.xlu0 %1862
    %1864 = vrot.lane.b32.xlu0 %v1521, 64
    %v1865 = vpop.permute.xlu0 %1864
    %1866 = vrot.lane.b32.xlu0 %v1522, 64
    %v1867 = vpop.permute.xlu0 %1866
    %1868 = vrot.lane.b32.xlu0 %v1523, 64
    %v1869 = vpop.permute.xlu0 %1868
    %1870 = vrot.lane.b32.xlu0 %v1524, 64
    %v1871 = vpop.permute.xlu0 %1870
    %1872 = vrot.lane.b32.xlu0 %v1525, 64
    %v1873 = vpop.permute.xlu0 %1872
    %1874 = vrot.lane.b32.xlu0 %v1526, 64
    %v1875 = vpop.permute.xlu0 %1874
    %1876 = vrot.lane.b32.xlu0 %v1527, 64
    %v1877 = vpop.permute.xlu0 %1876
    %1878 = vrot.lane.b32.xlu0 %v1528, 64
    %v1879 = vpop.permute.xlu0 %1878
    %1880 = vrot.lane.b32.xlu0 %v1529, 64
    %v1881 = vpop.permute.xlu0 %1880
    %v1898 = vsel %vm472, %v1498, %v1851
    %v1899 = vsel %vm472, %v1499, %v1853
    %v1900 = vsel %vm472, %v1500, %v1855
    %v1901 = vsel %vm472, %v1501, %v1857
    %v1902 = vsel %vm472, %v1502, %v1859
    %v1903 = vsel %vm472, %v1503, %v1861
    %v1904 = vsel %vm472, %v1504, %v1863
    %v1905 = vsel %vm472, %v1505, %v1865
    %v1906 = vsel %vm472, %v1506, %v1867
    %v1907 = vsel %vm472, %v1507, %v1869
    %v1908 = vsel %vm472, %v1508, %v1871
    %v1909 = vsel %vm472, %v1509, %v1873
    %v1910 = vsel %vm472, %v1510, %v1875
    %v1911 = vsel %vm472, %v1511, %v1877
    %v1912 = vsel %vm472, %v1512, %v1879
    %v1913 = vsel %vm472, %v1513, %v1881
    %1914 = vst [vmem:[#allocation2 + $0x18] sm:$0xff] %v1898
    %1915 = vst [vmem:[#allocation2 + $0x40] sm:$0xff] %v1899
    %1916 = vst [vmem:[#allocation2 + $0x68] sm:$0xff] %v1900
    %1917 = vst [vmem:[#allocation2 + $0x90] sm:$0xff] %v1901
    %1918 = vst [vmem:[#allocation2 + $0xb8] sm:$0xff] %v1902
    %1919 = vst [vmem:[#allocation2 + $0xe0] sm:$0xff] %v1903
    %1920 = vst [vmem:[#allocation2 + $0x108] sm:$0xff] %v1904
    %1921 = vst [vmem:[#allocation2 + $0x130] sm:$0xff] %v1905
    %1922 = vst [vmem:[#allocation2 + $0x158] sm:$0xff] %v1906
    %1923 = vst [vmem:[#allocation2 + $0x180] sm:$0xff] %v1907
    %1924 = vst [vmem:[#allocation2 + $0x1a8] sm:$0xff] %v1908
    %1925 = vst [vmem:[#allocation2 + $0x1d0] sm:$0xff] %v1909
    %1926 = vst [vmem:[#allocation2 + $0x1f8] sm:$0xff] %v1910
    %1927 = vst [vmem:[#allocation2 + $0x220] sm:$0xff] %v1911
    %1928 = vst [vmem:[#allocation2 + $0x248] sm:$0xff] %v1912
    %1929 = vst [vmem:[#allocation2 + $0x270] sm:$0xff] %v1913
    %1930 = vst.msk [vmem:[#allocation2 + $0x20] sm:$0xff] %vm472, %v1530
    %1931 = vst.msk [vmem:[#allocation2 + $0x48] sm:$0xff] %vm472, %v1531
    %1932 = vst.msk [vmem:[#allocation2 + $0x70] sm:$0xff] %vm472, %v1532
    %1933 = vst.msk [vmem:[#allocation2 + $0x98] sm:$0xff] %vm472, %v1533
    %1934 = vst.msk [vmem:[#allocation2 + $0xc0] sm:$0xff] %vm472, %v1534
    %1935 = vst.msk [vmem:[#allocation2 + $0xe8] sm:$0xff] %vm472, %v1535
    %1936 = vst.msk [vmem:[#allocation2 + $0x110] sm:$0xff] %vm472, %v1536
    %1937 = vst.msk [vmem:[#allocation2 + $0x138] sm:$0xff] %vm472, %v1537
    %1938 = vst.msk [vmem:[#allocation2 + $0x160] sm:$0xff] %vm472, %v1538
    %1939 = vst.msk [vmem:[#allocation2 + $0x188] sm:$0xff] %vm472, %v1539
    %1940 = vst.msk [vmem:[#allocation2 + $0x1b0] sm:$0xff] %vm472, %v1540
    %1941 = vst.msk [vmem:[#allocation2 + $0x1d8] sm:$0xff] %vm472, %v1541
    %1942 = vst.msk [vmem:[#allocation2 + $0x200] sm:$0xff] %vm472, %v1542
    %1943 = vst.msk [vmem:[#allocation2 + $0x228] sm:$0xff] %vm472, %v1543
    %1944 = vst.msk [vmem:[#allocation2 + $0x250] sm:$0xff] %vm472, %v1544
    %1945 = vst.msk [vmem:[#allocation2 + $0x278] sm:$0xff] %vm472, %v1545
    %v1946 = vld [vmem:[#allocation2] sm:$0xff]
    %v1947 = vld [vmem:[#allocation2 + $0x8] sm:$0xff]
    %v1948 = vld [vmem:[#allocation2 + $0x10] sm:$0xff]
    %v1949 = vld [vmem:[#allocation2 + $0x18] sm:$0xff]
    %v1950 = vld [vmem:[#allocation2 + $0x20] sm:$0xff]
    %v1951 = vld [vmem:[#allocation2 + $0x28] sm:$0xff]
    %v1952 = vld [vmem:[#allocation2 + $0x30] sm:$0xff]
    %v1953 = vld [vmem:[#allocation2 + $0x38] sm:$0xff]
    %v1954 = vld [vmem:[#allocation2 + $0x40] sm:$0xff]
    %v1955 = vld [vmem:[#allocation2 + $0x48] sm:$0xff]
    %v1956 = vld [vmem:[#allocation2 + $0x50] sm:$0xff]
    %v1957 = vld [vmem:[#allocation2 + $0x58] sm:$0xff]
    %v1958 = vld [vmem:[#allocation2 + $0x60] sm:$0xff]
    %v1959 = vld [vmem:[#allocation2 + $0x68] sm:$0xff]
    %v1960 = vld [vmem:[#allocation2 + $0x70] sm:$0xff]
    %v1961 = vld [vmem:[#allocation2 + $0x78] sm:$0xff]
    %v1962 = vld [vmem:[#allocation2 + $0x80] sm:$0xff]
    %v1963 = vld [vmem:[#allocation2 + $0x88] sm:$0xff]
    %v1964 = vld [vmem:[#allocation2 + $0x90] sm:$0xff]
    %v1965 = vld [vmem:[#allocation2 + $0x98] sm:$0xff]
    %v1966 = vld [vmem:[#allocation2 + $0xa0] sm:$0xff]
    %v1967 = vld [vmem:[#allocation2 + $0xa8] sm:$0xff]
    %v1968 = vld [vmem:[#allocation2 + $0xb0] sm:$0xff]
    %v1969 = vld [vmem:[#allocation2 + $0xb8] sm:$0xff]
    %v1970 = vld [vmem:[#allocation2 + $0xc0] sm:$0xff]
    %v1971 = vld [vmem:[#allocation2 + $0xc8] sm:$0xff]
    %v1972 = vld [vmem:[#allocation2 + $0xd0] sm:$0xff]
    %v1973 = vld [vmem:[#allocation2 + $0xd8] sm:$0xff]
    %v1974 = vld [vmem:[#allocation2 + $0xe0] sm:$0xff]
    %v1975 = vld [vmem:[#allocation2 + $0xe8] sm:$0xff]
    %v1976 = vld [vmem:[#allocation2 + $0xf0] sm:$0xff]
    %v1977 = vld [vmem:[#allocation2 + $0xf8] sm:$0xff]
    %v1978 = vld [vmem:[#allocation2 + $0x100] sm:$0xff]
    %v1979 = vld [vmem:[#allocation2 + $0x108] sm:$0xff]
    %v1980 = vld [vmem:[#allocation2 + $0x110] sm:$0xff]
    %v1981 = vld [vmem:[#allocation2 + $0x118] sm:$0xff]
    %v1982 = vld [vmem:[#allocation2 + $0x120] sm:$0xff]
    %v1983 = vld [vmem:[#allocation2 + $0x128] sm:$0xff]
    %v1984 = vld [vmem:[#allocation2 + $0x130] sm:$0xff]
    %v1985 = vld [vmem:[#allocation2 + $0x138] sm:$0xff]
    %v1986 = vld [vmem:[#allocation2 + $0x140] sm:$0xff]
    %v1987 = vld [vmem:[#allocation2 + $0x148] sm:$0xff]
    %v1988 = vld [vmem:[#allocation2 + $0x150] sm:$0xff]
    %v1989 = vld [vmem:[#allocation2 + $0x158] sm:$0xff]
    %v1990 = vld [vmem:[#allocation2 + $0x160] sm:$0xff]
    %v1991 = vld [vmem:[#allocation2 + $0x168] sm:$0xff]
    %v1992 = vld [vmem:[#allocation2 + $0x170] sm:$0xff]
    %v1993 = vld [vmem:[#allocation2 + $0x178] sm:$0xff]
    %v1994 = vld [vmem:[#allocation2 + $0x180] sm:$0xff]
    %v1995 = vld [vmem:[#allocation2 + $0x188] sm:$0xff]
    %v1996 = vld [vmem:[#allocation2 + $0x190] sm:$0xff]
    %v1997 = vld [vmem:[#allocation2 + $0x198] sm:$0xff]
    %v1998 = vld [vmem:[#allocation2 + $0x1a0] sm:$0xff]
    %v1999 = vld [vmem:[#allocation2 + $0x1a8] sm:$0xff]
    %v2000 = vld [vmem:[#allocation2 + $0x1b0] sm:$0xff]
    %v2001 = vld [vmem:[#allocation2 + $0x1b8] sm:$0xff]
    %v2002 = vld [vmem:[#allocation2 + $0x1c0] sm:$0xff]
    %v2003 = vld [vmem:[#allocation2 + $0x1c8] sm:$0xff]
    %v2004 = vld [vmem:[#allocation2 + $0x1d0] sm:$0xff]
    %v2005 = vld [vmem:[#allocation2 + $0x1d8] sm:$0xff]
    %v2006 = vld [vmem:[#allocation2 + $0x1e0] sm:$0xff]
    %v2007 = vld [vmem:[#allocation2 + $0x1e8] sm:$0xff]
    %v2008 = vld [vmem:[#allocation2 + $0x1f0] sm:$0xff]
    %v2009 = vld [vmem:[#allocation2 + $0x1f8] sm:$0xff]
    %v2010 = vld [vmem:[#allocation2 + $0x200] sm:$0xff]
    %v2011 = vld [vmem:[#allocation2 + $0x208] sm:$0xff]
    %v2012 = vld [vmem:[#allocation2 + $0x210] sm:$0xff]
    %v2013 = vld [vmem:[#allocation2 + $0x218] sm:$0xff]
    %v2014 = vld [vmem:[#allocation2 + $0x220] sm:$0xff]
    %v2015 = vld [vmem:[#allocation2 + $0x228] sm:$0xff]
    %v2016 = vld [vmem:[#allocation2 + $0x230] sm:$0xff]
    %v2017 = vld [vmem:[#allocation2 + $0x238] sm:$0xff]
    %v2018 = vld [vmem:[#allocation2 + $0x240] sm:$0xff]
    %v2019 = vld [vmem:[#allocation2 + $0x248] sm:$0xff]
    %v2020 = vld [vmem:[#allocation2 + $0x250] sm:$0xff]
    %v2021 = vld [vmem:[#allocation2 + $0x258] sm:$0xff]
    %v2022 = vld [vmem:[#allocation2 + $0x260] sm:$0xff]
    %v2023 = vld [vmem:[#allocation2 + $0x268] sm:$0xff]
    %v2024 = vld [vmem:[#allocation2 + $0x270] sm:$0xff]
    %v2025 = vld [vmem:[#allocation2 + $0x278] sm:$0xff]
    %v2026 = vld [vmem:[%s3] sm:$0xff]
    %v2027 = vld [vmem:[%s3 + $0x8] sm:$0xff]
    %v2028 = vld [vmem:[%s3 + $0x10] sm:$0xff]
    %v2029 = vld [vmem:[%s3 + $0x18] sm:$0xff]
    %v2030 = vld [vmem:[%s3 + $0x20] sm:$0xff]
    %v2031 = vld [vmem:[%s3 + $0x28] sm:$0xff]
    %v2032 = vld [vmem:[%s3 + $0x30] sm:$0xff]
    %v2033 = vld [vmem:[%s3 + $0x38] sm:$0xff]
    %v2034 = vld [vmem:[%s3 + $0x40] sm:$0xff]
    %v2035 = vld [vmem:[%s3 + $0x48] sm:$0xff]
    %v2036 = vld [vmem:[%s3 + $0x50] sm:$0xff]
    %v2037 = vld [vmem:[%s3 + $0x58] sm:$0xff]
    %v2038 = vld [vmem:[%s3 + $0x60] sm:$0xff]
    %v2039 = vld [vmem:[%s3 + $0x68] sm:$0xff]
    %v2040 = vld [vmem:[%s3 + $0x70] sm:$0xff]
    %v2041 = vld [vmem:[%s3 + $0x78] sm:$0xff]
    %v2042 = vld [vmem:[%s3 + $0x80] sm:$0xff]
    %v2043 = vld [vmem:[%s3 + $0x88] sm:$0xff]
    %v2044 = vld [vmem:[%s3 + $0x90] sm:$0xff]
    %v2045 = vld [vmem:[%s3 + $0x98] sm:$0xff]
    %v2046 = vld [vmem:[%s3 + $0xa0] sm:$0xff]
    %v2047 = vld [vmem:[%s3 + $0xa8] sm:$0xff]
    %v2048 = vld [vmem:[%s3 + $0xb0] sm:$0xff]
    %v2049 = vld [vmem:[%s3 + $0xb8] sm:$0xff]
    %v2050 = vld [vmem:[%s3 + $0xc0] sm:$0xff]
    %v2051 = vld [vmem:[%s3 + $0xc8] sm:$0xff]
    %v2052 = vld [vmem:[%s3 + $0xd0] sm:$0xff]
    %v2053 = vld [vmem:[%s3 + $0xd8] sm:$0xff]
    %v2054 = vld [vmem:[%s3 + $0xe0] sm:$0xff]
    %v2055 = vld [vmem:[%s3 + $0xe8] sm:$0xff]
    %v2056 = vld [vmem:[%s3 + $0xf0] sm:$0xff]
    %v2057 = vld [vmem:[%s3 + $0xf8] sm:$0xff]
    %v2058 = vld [vmem:[%s3 + $0x100] sm:$0xff]
    %v2059 = vld [vmem:[%s3 + $0x108] sm:$0xff]
    %v2060 = vld [vmem:[%s3 + $0x110] sm:$0xff]
    %v2061 = vld [vmem:[%s3 + $0x118] sm:$0xff]
    %v2062 = vld [vmem:[%s3 + $0x120] sm:$0xff]
    %v2063 = vld [vmem:[%s3 + $0x128] sm:$0xff]
    %v2064 = vld [vmem:[%s3 + $0x130] sm:$0xff]
    %v2065 = vld [vmem:[%s3 + $0x138] sm:$0xff]
    %v2066 = vld [vmem:[%s3 + $0x140] sm:$0xff]
    %v2067 = vld [vmem:[%s3 + $0x148] sm:$0xff]
    %v2068 = vld [vmem:[%s3 + $0x150] sm:$0xff]
    %v2069 = vld [vmem:[%s3 + $0x158] sm:$0xff]
    %v2070 = vld [vmem:[%s3 + $0x160] sm:$0xff]
    %v2071 = vld [vmem:[%s3 + $0x168] sm:$0xff]
    %v2072 = vld [vmem:[%s3 + $0x170] sm:$0xff]
    %v2073 = vld [vmem:[%s3 + $0x178] sm:$0xff]
    %v2074 = vld [vmem:[%s3 + $0x180] sm:$0xff]
    %v2075 = vld [vmem:[%s3 + $0x188] sm:$0xff]
    %v2076 = vld [vmem:[%s3 + $0x190] sm:$0xff]
    %v2077 = vld [vmem:[%s3 + $0x198] sm:$0xff]
    %v2078 = vld [vmem:[%s3 + $0x1a0] sm:$0xff]
    %v2079 = vld [vmem:[%s3 + $0x1a8] sm:$0xff]
    %v2080 = vld [vmem:[%s3 + $0x1b0] sm:$0xff]
    %v2081 = vld [vmem:[%s3 + $0x1b8] sm:$0xff]
    %v2082 = vld [vmem:[%s3 + $0x1c0] sm:$0xff]
    %v2083 = vld [vmem:[%s3 + $0x1c8] sm:$0xff]
    %v2084 = vld [vmem:[%s3 + $0x1d0] sm:$0xff]
    %v2085 = vld [vmem:[%s3 + $0x1d8] sm:$0xff]
    %v2086 = vld [vmem:[%s3 + $0x1e0] sm:$0xff]
    %v2087 = vld [vmem:[%s3 + $0x1e8] sm:$0xff]
    %v2088 = vld [vmem:[%s3 + $0x1f0] sm:$0xff]
    %v2089 = vld [vmem:[%s3 + $0x1f8] sm:$0xff]
    %v2090 = vld [vmem:[%s3 + $0x200] sm:$0xff]
    %v2091 = vld [vmem:[%s3 + $0x208] sm:$0xff]
    %v2092 = vld [vmem:[%s3 + $0x210] sm:$0xff]
    %v2093 = vld [vmem:[%s3 + $0x218] sm:$0xff]
    %v2094 = vld [vmem:[%s3 + $0x220] sm:$0xff]
    %v2095 = vld [vmem:[%s3 + $0x228] sm:$0xff]
    %v2096 = vld [vmem:[%s3 + $0x230] sm:$0xff]
    %v2097 = vld [vmem:[%s3 + $0x238] sm:$0xff]
    %v2098 = vld [vmem:[%s4] sm:$0x1]
    %v2100 = vperm.slane %v2098, 0
    %v2103 = vsel %vm472, %v1950, 0
    %v2106 = vsel %vm472, %v1955, 0
    %v2109 = vsel %vm472, %v1960, 0
    %v2112 = vsel %vm472, %v1965, 0
    %v2115 = vsel %vm472, %v1970, 0
    %v2118 = vsel %vm472, %v1975, 0
    %v2121 = vsel %vm472, %v1980, 0
    %v2124 = vsel %vm472, %v1985, 0
    %v2127 = vsel %vm472, %v1990, 0
    %v2130 = vsel %vm472, %v1995, 0
    %v2133 = vsel %vm472, %v2000, 0
    %v2136 = vsel %vm472, %v2005, 0
    %v2139 = vsel %vm472, %v2010, 0
    %v2142 = vsel %vm472, %v2015, 0
    %v2145 = vsel %vm472, %v2020, 0
    %v2148 = vsel %vm472, %v2025, 0
    %2150 = vmatpush.msra.mxu0 %v2041
    %2151 = vmatpush.msra.mxu0 %v2040
    %2152 = vmatpush.msra.mxu0 %v2039
    %2153 = vmatpush.msra.mxu0 %v2038
    %2154 = vmatpush.msra.mxu0 %v2037
    %2155 = vmatpush.msra.mxu0 %v2036
    %2156 = vmatpush.msra.mxu0 %v2035
    %2157 = vmatpush.msra.mxu0 %v2034
    %2158 = vmatpush.msra.mxu0 %v2033
    %2159 = vmatpush.msra.mxu0 %v2032
    %2160 = vmatpush.msra.mxu0 %v2031
    %2161 = vmatpush.msra.mxu0 %v2030
    %2162 = vmatpush.msra.mxu0 %v2029
    %2163 = vmatpush.msra.mxu0 %v2028
    %2164 = vmatpush.msra.mxu0 %v2027
    %2165 = vmatpush.msra.mxu0 %v2026
    %2166 = vmatmul.f32.gmra.mxu0 %v1946
    %v2167 = vpop.f32.mrf.mxu0
    %v2168 = vadd.f32 %v2100, %v2167
    %2169 = vmatmul.f32.gmra.mxu0 %v1951
    %v2170 = vpop.f32.mrf.mxu0
    %v2171 = vadd.f32 %v2100, %v2170
    %2172 = vmatmul.f32.gmra.mxu0 %v1956
    %v2173 = vpop.f32.mrf.mxu0
    %v2174 = vadd.f32 %v2100, %v2173
    %2175 = vmatmul.f32.gmra.mxu0 %v1961
    %v2176 = vpop.f32.mrf.mxu0
    %v2177 = vadd.f32 %v2100, %v2176
    %2178 = vmatmul.f32.gmra.mxu0 %v1966
    %v2179 = vpop.f32.mrf.mxu0
    %v2180 = vadd.f32 %v2100, %v2179
    %2181 = vmatmul.f32.gmra.mxu0 %v1971
    %v2182 = vpop.f32.mrf.mxu0
    %v2183 = vadd.f32 %v2100, %v2182
    %2184 = vmatmul.f32.gmra.mxu0 %v1976
    %v2185 = vpop.f32.mrf.mxu0
    %v2186 = vadd.f32 %v2100, %v2185
    %2187 = vmatmul.f32.gmra.mxu0 %v1981
    %v2188 = vpop.f32.mrf.mxu0
    %v2189 = vadd.f32 %v2100, %v2188
    %2190 = vmatmul.f32.gmra.mxu0 %v1986
    %v2191 = vpop.f32.mrf.mxu0
    %v2192 = vadd.f32 %v2100, %v2191
    %2193 = vmatmul.f32.gmra.mxu0 %v1991
    %v2194 = vpop.f32.mrf.mxu0
    %v2195 = vadd.f32 %v2100, %v2194
    %2196 = vmatmul.f32.gmra.mxu0 %v1996
    %v2197 = vpop.f32.mrf.mxu0
    %v2198 = vadd.f32 %v2100, %v2197
    %2199 = vmatmul.f32.gmra.mxu0 %v2001
    %v2200 = vpop.f32.mrf.mxu0
    %v2201 = vadd.f32 %v2100, %v2200
    %2202 = vmatmul.f32.gmra.mxu0 %v2006
    %v2203 = vpop.f32.mrf.mxu0
    %v2204 = vadd.f32 %v2100, %v2203
    %2205 = vmatmul.f32.gmra.mxu0 %v2011
    %v2206 = vpop.f32.mrf.mxu0
    %v2207 = vadd.f32 %v2100, %v2206
    %2208 = vmatmul.f32.gmra.mxu0 %v2016
    %v2209 = vpop.f32.mrf.mxu0
    %v2210 = vadd.f32 %v2100, %v2209
    %2211 = vmatmul.f32.gmra.mxu0 %v2021
    %v2212 = vpop.f32.mrf.mxu0
    %v2213 = vadd.f32 %v2100, %v2212
    %2214 = vdwg.mxu0
    %2215 = vmatpush.msra.mxu0 %v2057
    %2216 = vmatpush.msra.mxu0 %v2056
    %2217 = vmatpush.msra.mxu0 %v2055
    %2218 = vmatpush.msra.mxu0 %v2054
    %2219 = vmatpush.msra.mxu0 %v2053
    %2220 = vmatpush.msra.mxu0 %v2052
    %2221 = vmatpush.msra.mxu0 %v2051
    %2222 = vmatpush.msra.mxu0 %v2050
    %2223 = vmatpush.msra.mxu0 %v2049
    %2224 = vmatpush.msra.mxu0 %v2048
    %2225 = vmatpush.msra.mxu0 %v2047
    %2226 = vmatpush.msra.mxu0 %v2046
    %2227 = vmatpush.msra.mxu0 %v2045
    %2228 = vmatpush.msra.mxu0 %v2044
    %2229 = vmatpush.msra.mxu0 %v2043
    %2230 = vmatpush.msra.mxu0 %v2042
    %2231 = vmatmul.f32.gmra.mxu0 %v1947
    %v2232 = vpop.f32.mrf.mxu0
    %v2233 = vadd.f32 %v2168, %v2232
    %2234 = vmatmul.f32.gmra.mxu0 %v1952
    %v2235 = vpop.f32.mrf.mxu0
    %v2236 = vadd.f32 %v2171, %v2235
    %2237 = vmatmul.f32.gmra.mxu0 %v1957
    %v2238 = vpop.f32.mrf.mxu0
    %v2239 = vadd.f32 %v2174, %v2238
    %2240 = vmatmul.f32.gmra.mxu0 %v1962
    %v2241 = vpop.f32.mrf.mxu0
    %v2242 = vadd.f32 %v2177, %v2241
    %2243 = vmatmul.f32.gmra.mxu0 %v1967
    %v2244 = vpop.f32.mrf.mxu0
    %v2245 = vadd.f32 %v2180, %v2244
    %2246 = vmatmul.f32.gmra.mxu0 %v1972
    %v2247 = vpop.f32.mrf.mxu0
    %v2248 = vadd.f32 %v2183, %v2247
    %2249 = vmatmul.f32.gmra.mxu0 %v1977
    %v2250 = vpop.f32.mrf.mxu0
    %v2251 = vadd.f32 %v2186, %v2250
    %2252 = vmatmul.f32.gmra.mxu0 %v1982
    %v2253 = vpop.f32.mrf.mxu0
    %v2254 = vadd.f32 %v2189, %v2253
    %2255 = vmatmul.f32.gmra.mxu0 %v1987
    %v2256 = vpop.f32.mrf.mxu0
    %v2257 = vadd.f32 %v2192, %v2256
    %2258 = vmatmul.f32.gmra.mxu0 %v1992
    %v2259 = vpop.f32.mrf.mxu0
    %v2260 = vadd.f32 %v2195, %v2259
    %2261 = vmatmul.f32.gmra.mxu0 %v1997
    %v2262 = vpop.f32.mrf.mxu0
    %v2263 = vadd.f32 %v2198, %v2262
    %2264 = vmatmul.f32.gmra.mxu0 %v2002
    %v2265 = vpop.f32.mrf.mxu0
    %v2266 = vadd.f32 %v2201, %v2265
    %2267 = vmatmul.f32.gmra.mxu0 %v2007
    %v2268 = vpop.f32.mrf.mxu0
    %v2269 = vadd.f32 %v2204, %v2268
    %2270 = vmatmul.f32.gmra.mxu0 %v2012
    %v2271 = vpop.f32.mrf.mxu0
    %v2272 = vadd.f32 %v2207, %v2271
    %2273 = vmatmul.f32.gmra.mxu0 %v2017
    %v2274 = vpop.f32.mrf.mxu0
    %v2275 = vadd.f32 %v2210, %v2274
    %2276 = vmatmul.f32.gmra.mxu0 %v2022
    %v2277 = vpop.f32.mrf.mxu0
    %v2278 = vadd.f32 %v2213, %v2277
    %2279 = vdwg.mxu0
    %2280 = vmatpush.msra.mxu0 %v2073
    %2281 = vmatpush.msra.mxu0 %v2072
    %2282 = vmatpush.msra.mxu0 %v2071
    %2283 = vmatpush.msra.mxu0 %v2070
    %2284 = vmatpush.msra.mxu0 %v2069
    %2285 = vmatpush.msra.mxu0 %v2068
    %2286 = vmatpush.msra.mxu0 %v2067
    %2287 = vmatpush.msra.mxu0 %v2066
    %2288 = vmatpush.msra.mxu0 %v2065
    %2289 = vmatpush.msra.mxu0 %v2064
    %2290 = vmatpush.msra.mxu0 %v2063
    %2291 = vmatpush.msra.mxu0 %v2062
    %2292 = vmatpush.msra.mxu0 %v2061
    %2293 = vmatpush.msra.mxu0 %v2060
    %2294 = vmatpush.msra.mxu0 %v2059
    %2295 = vmatpush.msra.mxu0 %v2058
    %2296 = vmatmul.f32.gmra.mxu0 %v1948
    %v2297 = vpop.f32.mrf.mxu0
    %v2298 = vadd.f32 %v2233, %v2297
    %2299 = vmatmul.f32.gmra.mxu0 %v1953
    %v2300 = vpop.f32.mrf.mxu0
    %v2301 = vadd.f32 %v2236, %v2300
    %2302 = vmatmul.f32.gmra.mxu0 %v1958
    %v2303 = vpop.f32.mrf.mxu0
    %v2304 = vadd.f32 %v2239, %v2303
    %2305 = vmatmul.f32.gmra.mxu0 %v1963
    %v2306 = vpop.f32.mrf.mxu0
    %v2307 = vadd.f32 %v2242, %v2306
    %2308 = vmatmul.f32.gmra.mxu0 %v1968
    %v2309 = vpop.f32.mrf.mxu0
    %v2310 = vadd.f32 %v2245, %v2309
    %2311 = vmatmul.f32.gmra.mxu0 %v1973
    %v2312 = vpop.f32.mrf.mxu0
    %v2313 = vadd.f32 %v2248, %v2312
    %2314 = vmatmul.f32.gmra.mxu0 %v1978
    %v2315 = vpop.f32.mrf.mxu0
    %v2316 = vadd.f32 %v2251, %v2315
    %2317 = vmatmul.f32.gmra.mxu0 %v1983
    %v2318 = vpop.f32.mrf.mxu0
    %v2319 = vadd.f32 %v2254, %v2318
    %2320 = vmatmul.f32.gmra.mxu0 %v1988
    %v2321 = vpop.f32.mrf.mxu0
    %v2322 = vadd.f32 %v2257, %v2321
    %2323 = vmatmul.f32.gmra.mxu0 %v1993
    %v2324 = vpop.f32.mrf.mxu0
    %v2325 = vadd.f32 %v2260, %v2324
    %2326 = vmatmul.f32.gmra.mxu0 %v1998
    %v2327 = vpop.f32.mrf.mxu0
    %v2328 = vadd.f32 %v2263, %v2327
    %2329 = vmatmul.f32.gmra.mxu0 %v2003
    %v2330 = vpop.f32.mrf.mxu0
    %v2331 = vadd.f32 %v2266, %v2330
    %2332 = vmatmul.f32.gmra.mxu0 %v2008
    %v2333 = vpop.f32.mrf.mxu0
    %v2334 = vadd.f32 %v2269, %v2333
    %2335 = vmatmul.f32.gmra.mxu0 %v2013
    %v2336 = vpop.f32.mrf.mxu0
    %v2337 = vadd.f32 %v2272, %v2336
    %2338 = vmatmul.f32.gmra.mxu0 %v2018
    %v2339 = vpop.f32.mrf.mxu0
    %v2340 = vadd.f32 %v2275, %v2339
    %2341 = vmatmul.f32.gmra.mxu0 %v2023
    %v2342 = vpop.f32.mrf.mxu0
    %v2343 = vadd.f32 %v2278, %v2342
    %2344 = vdwg.mxu0
    %2345 = vmatpush.msra.mxu0 %v2089
    %2346 = vmatpush.msra.mxu0 %v2088
    %2347 = vmatpush.msra.mxu0 %v2087
    %2348 = vmatpush.msra.mxu0 %v2086
    %2349 = vmatpush.msra.mxu0 %v2085
    %2350 = vmatpush.msra.mxu0 %v2084
    %2351 = vmatpush.msra.mxu0 %v2083
    %2352 = vmatpush.msra.mxu0 %v2082
    %2353 = vmatpush.msra.mxu0 %v2081
    %2354 = vmatpush.msra.mxu0 %v2080
    %2355 = vmatpush.msra.mxu0 %v2079
    %2356 = vmatpush.msra.mxu0 %v2078
    %2357 = vmatpush.msra.mxu0 %v2077
    %2358 = vmatpush.msra.mxu0 %v2076
    %2359 = vmatpush.msra.mxu0 %v2075
    %2360 = vmatpush.msra.mxu0 %v2074
    %2361 = vmatmul.f32.gmra.mxu0 %v1949
    %v2362 = vpop.f32.mrf.mxu0
    %v2363 = vadd.f32 %v2298, %v2362
    %2364 = vmatmul.f32.gmra.mxu0 %v1954
    %v2365 = vpop.f32.mrf.mxu0
    %v2366 = vadd.f32 %v2301, %v2365
    %2367 = vmatmul.f32.gmra.mxu0 %v1959
    %v2368 = vpop.f32.mrf.mxu0
    %v2369 = vadd.f32 %v2304, %v2368
    %2370 = vmatmul.f32.gmra.mxu0 %v1964
    %v2371 = vpop.f32.mrf.mxu0
    %v2372 = vadd.f32 %v2307, %v2371
    %2373 = vmatmul.f32.gmra.mxu0 %v1969
    %v2374 = vpop.f32.mrf.mxu0
    %v2375 = vadd.f32 %v2310, %v2374
    %2376 = vmatmul.f32.gmra.mxu0 %v1974
    %v2377 = vpop.f32.mrf.mxu0
    %v2378 = vadd.f32 %v2313, %v2377
    %2379 = vmatmul.f32.gmra.mxu0 %v1979
    %v2380 = vpop.f32.mrf.mxu0
    %v2381 = vadd.f32 %v2316, %v2380
    %2382 = vmatmul.f32.gmra.mxu0 %v1984
    %v2383 = vpop.f32.mrf.mxu0
    %v2384 = vadd.f32 %v2319, %v2383
    %2385 = vmatmul.f32.gmra.mxu0 %v1989
    %v2386 = vpop.f32.mrf.mxu0
    %v2387 = vadd.f32 %v2322, %v2386
    %2388 = vmatmul.f32.gmra.mxu0 %v1994
    %v2389 = vpop.f32.mrf.mxu0
    %v2390 = vadd.f32 %v2325, %v2389
    %2391 = vmatmul.f32.gmra.mxu0 %v1999
    %v2392 = vpop.f32.mrf.mxu0
    %v2393 = vadd.f32 %v2328, %v2392
    %2394 = vmatmul.f32.gmra.mxu0 %v2004
    %v2395 = vpop.f32.mrf.mxu0
    %v2396 = vadd.f32 %v2331, %v2395
    %2397 = vmatmul.f32.gmra.mxu0 %v2009
    %v2398 = vpop.f32.mrf.mxu0
    %v2399 = vadd.f32 %v2334, %v2398
    %2400 = vmatmul.f32.gmra.mxu0 %v2014
    %v2401 = vpop.f32.mrf.mxu0
    %v2402 = vadd.f32 %v2337, %v2401
    %2403 = vmatmul.f32.gmra.mxu0 %v2019
    %v2404 = vpop.f32.mrf.mxu0
    %v2405 = vadd.f32 %v2340, %v2404
    %2406 = vmatmul.f32.gmra.mxu0 %v2024
    %v2407 = vpop.f32.mrf.mxu0
    %v2408 = vadd.f32 %v2343, %v2407
    %2409 = vdwg.mxu0
    %2410 = vmatpush.msra.mxu0 0.0
    %2411 = vmatpush.msra.mxu0 0.0
    %2412 = vmatpush.msra.mxu0 0.0
    %2413 = vmatpush.msra.mxu0 0.0
    %2414 = vmatpush.msra.mxu0 0.0
    %2415 = vmatpush.msra.mxu0 0.0
    %2416 = vmatpush.msra.mxu0 0.0
    %2417 = vmatpush.msra.mxu0 0.0
    %2418 = vmatpush.msra.mxu0 %v2097
    %2419 = vmatpush.msra.mxu0 %v2096
    %2420 = vmatpush.msra.mxu0 %v2095
    %2421 = vmatpush.msra.mxu0 %v2094
    %2422 = vmatpush.msra.mxu0 %v2093
    %2423 = vmatpush.msra.mxu0 %v2092
    %2424 = vmatpush.msra.mxu0 %v2091
    %2425 = vmatpush.msra.mxu0 %v2090
    %2426 = vmatmul.f32.gmra.mxu0 %v2103
    %v2427 = vpop.f32.mrf.mxu0
    %v2428 = vadd.f32 %v2363, %v2427
    %2429 = vmatmul.f32.gmra.mxu0 %v2106
    %v2430 = vpop.f32.mrf.mxu0
    %v2431 = vadd.f32 %v2366, %v2430
    %2432 = vmatmul.f32.gmra.mxu0 %v2109
    %v2433 = vpop.f32.mrf.mxu0
    %v2434 = vadd.f32 %v2369, %v2433
    %2435 = vmatmul.f32.gmra.mxu0 %v2112
    %v2436 = vpop.f32.mrf.mxu0
    %v2437 = vadd.f32 %v2372, %v2436
    %2438 = vmatmul.f32.gmra.mxu0 %v2115
    %v2439 = vpop.f32.mrf.mxu0
    %v2440 = vadd.f32 %v2375, %v2439
    %2441 = vmatmul.f32.gmra.mxu0 %v2118
    %v2442 = vpop.f32.mrf.mxu0
    %v2443 = vadd.f32 %v2378, %v2442
    %2444 = vmatmul.f32.gmra.mxu0 %v2121
    %v2445 = vpop.f32.mrf.mxu0
    %v2446 = vadd.f32 %v2381, %v2445
    %2447 = vmatmul.f32.gmra.mxu0 %v2124
    %v2448 = vpop.f32.mrf.mxu0
    %v2449 = vadd.f32 %v2384, %v2448
    %2450 = vmatmul.f32.gmra.mxu0 %v2127
    %v2451 = vpop.f32.mrf.mxu0
    %v2452 = vadd.f32 %v2387, %v2451
    %2453 = vmatmul.f32.gmra.mxu0 %v2130
    %v2454 = vpop.f32.mrf.mxu0
    %v2455 = vadd.f32 %v2390, %v2454
    %2456 = vmatmul.f32.gmra.mxu0 %v2133
    %v2457 = vpop.f32.mrf.mxu0
    %v2458 = vadd.f32 %v2393, %v2457
    %2459 = vmatmul.f32.gmra.mxu0 %v2136
    %v2460 = vpop.f32.mrf.mxu0
    %v2461 = vadd.f32 %v2396, %v2460
    %2462 = vmatmul.f32.gmra.mxu0 %v2139
    %v2463 = vpop.f32.mrf.mxu0
    %v2464 = vadd.f32 %v2399, %v2463
    %2465 = vmatmul.f32.gmra.mxu0 %v2142
    %v2466 = vpop.f32.mrf.mxu0
    %v2467 = vadd.f32 %v2402, %v2466
    %2468 = vmatmul.f32.gmra.mxu0 %v2145
    %v2469 = vpop.f32.mrf.mxu0
    %v2470 = vadd.f32 %v2405, %v2469
    %2471 = vmatmul.f32.gmra.mxu0 %v2148
    %v2472 = vpop.f32.mrf.mxu0
    %v2473 = vadd.f32 %v2408, %v2472
    %2474 = vdwg.mxu0
    %2475 = vst.msk [vmem:[#allocation3] sm:$0xff] %vm472, %v2428
    %2476 = vst.msk [vmem:[#allocation3 + $0x8] sm:$0xff] %vm472, %v2431
    %2477 = vst.msk [vmem:[#allocation3 + $0x10] sm:$0xff] %vm472, %v2434
    %2478 = vst.msk [vmem:[#allocation3 + $0x18] sm:$0xff] %vm472, %v2437
    %2479 = vst.msk [vmem:[#allocation3 + $0x20] sm:$0xff] %vm472, %v2440
    %2480 = vst.msk [vmem:[#allocation3 + $0x28] sm:$0xff] %vm472, %v2443
    %2481 = vst.msk [vmem:[#allocation3 + $0x30] sm:$0xff] %vm472, %v2446
    %2482 = vst.msk [vmem:[#allocation3 + $0x38] sm:$0xff] %vm472, %v2449
    %2483 = vst.msk [vmem:[#allocation3 + $0x40] sm:$0xff] %vm472, %v2452
    %2484 = vst.msk [vmem:[#allocation3 + $0x48] sm:$0xff] %vm472, %v2455
    %2485 = vst.msk [vmem:[#allocation3 + $0x50] sm:$0xff] %vm472, %v2458
    %2486 = vst.msk [vmem:[#allocation3 + $0x58] sm:$0xff] %vm472, %v2461
    %2487 = vst.msk [vmem:[#allocation3 + $0x60] sm:$0xff] %vm472, %v2464
    %2488 = vst.msk [vmem:[#allocation3 + $0x68] sm:$0xff] %vm472, %v2467
    %2489 = vst.msk [vmem:[#allocation3 + $0x70] sm:$0xff] %vm472, %v2470
    %2490 = vst.msk [vmem:[#allocation3 + $0x78] sm:$0xff] %vm472, %v2473
    // Predicated region
    $region22: #{ode_func_forward.1} parent=1 // pred_check
      _
    $region23: #{ode_func_forward.1} parent=1 // pred_check_branch
      %2492 = sbr.rel (0) target = $region25
    $region24: #{ode_func_forward.1} parent=1 // pred_region
      %2494 = vsyncadd [#allocation4], 0
      %s2495 = sshll.u32 [#allocation3], 4
      %s2496 = int_to_ptr.vmem [resolvable:$true] %s2495
      %s2497 = sshll.u32 %s5, 4
      %s2498 = int_to_ptr.hbm [resolvable:$true] %s2497
      %2503 = dma.vmem_to_hbm [thread:$0]  %s2496, 2048, %s2498, [#allocation4], 128, 128, 8
    $region25: #{ode_func_forward.1} parent=1 // pred_fallthru
      _
    // Predicated region
    $region26: #{ode_func_forward.1} parent=1 // pred_check
      _
    $region27: #{ode_func_forward.1} parent=1 // pred_check_branch
      %2505 = sbr.rel (0) target = $region29
    $region28: #{ode_func_forward.1} parent=1 // pred_region
      %2507 = dma.done [#allocation4], 2048
    $region29: #{ode_func_forward.1} parent=1 // pred_fallthru
      _
    %2508 = vsyncpa [#allocation4], 1

</llo_original>
